<compile_context>
chip_gen: v5e
topology: v5e:2x2
jax: 0.10.0
libtpu: 0.0.40
codegen_flags: <defaults>
</compile_context>

<pallas_src>
import functools

import jax
import jax.numpy as jnp
from jax import lax
from jax.experimental import pallas as pl
from jax.experimental.pallas import tpu as pltpu


def attention_kernel(x_ref, wq_ref, wk_ref, wv_ref, wo_ref, bo_ref,
                     o_ref, acc_ref, *, scale):
    h = pl.program_id(1)

    x = x_ref[0]                                                             # [N, D]

    # Per-head QKV projection (scale folded into q on the small [N, dh] tile).
    q = jnp.dot(x, wq_ref[0], preferred_element_type=jnp.float32) * scale    # [N, dh]
    k = jnp.dot(x, wk_ref[0], preferred_element_type=jnp.float32)            # [N, dh]
    v = jnp.dot(x, wv_ref[0], preferred_element_type=jnp.float32)            # [N, dh]

    # dots = q @ k^T : contract the dim_head axes directly (no transpose pass).
    dots = lax.dot_general(q, k, (((1,), (1,)), ((), ())),
                           preferred_element_type=jnp.float32)               # [N, N]

    # Numerically stable softmax along the last axis.
    m = jnp.max(dots, axis=-1, keepdims=True)
    e = jnp.exp(dots - m)
    inv = pl.reciprocal(jnp.sum(e, axis=-1, keepdims=True))                  # [N, 1]
    attn = e * inv

    out_h = jnp.dot(attn, v, preferred_element_type=jnp.float32)             # [N, dh]

    # This head's slice of the output projection.
    contrib = jnp.dot(out_h, wo_ref[0], preferred_element_type=jnp.float32)  # [N, D]

    @pl.when(h == 0)
    def _():
        acc_ref[...] = jnp.zeros_like(acc_ref)

    acc_ref[...] += contrib

    @pl.when(h == pl.num_programs(1) - 1)
    def _():
        # Add the output-projection bias once; Dropout(p=0.0) is the identity.
        o_ref[0] = (acc_ref[...] + bo_ref[...]).astype(o_ref.dtype)


def attention_forward(x, wq_t, wk_t, wv_t, wo_t, bo, *, scale):
    """x: [B, N, D]; wq_t/wk_t/wv_t: [H, D, dh]; wo_t: [H, dh, D]; bo: [1, D]."""
    B, N, D = x.shape
    H, _, dh = wq_t.shape
    kernel = functools.partial(attention_kernel, scale=scale)
    return pl.pallas_call(
        kernel,
        out_shape=jax.ShapeDtypeStruct((B, N, D), jnp.float32),
        grid_spec=pltpu.PrefetchScalarGridSpec(
            num_scalar_prefetch=0,
            grid=(B, H),
            in_specs=[
                pl.BlockSpec((1, N, D), lambda b, h: (b, 0, 0)),    # x (resident over h)
                pl.BlockSpec((1, D, dh), lambda b, h: (h, 0, 0)),   # Wq per head
                pl.BlockSpec((1, D, dh), lambda b, h: (h, 0, 0)),   # Wk per head
                pl.BlockSpec((1, D, dh), lambda b, h: (h, 0, 0)),   # Wv per head
                pl.BlockSpec((1, dh, D), lambda b, h: (h, 0, 0)),   # Wo slice per head
                pl.BlockSpec((1, D), lambda b, h: (0, 0)),          # output bias
            ],
            out_specs=pl.BlockSpec((1, N, D), lambda b, h: (b, 0, 0)),
            scratch_shapes=[pltpu.VMEM((N, D), jnp.float32)],
        ),
        compiler_params=pltpu.CompilerParams(
            dimension_semantics=("parallel", "arbitrary")),
    )(x, wq_t, wk_t, wv_t, wo_t, bo)


def attention_ref(x, wq_t, wk_t, wv_t, wo_t, bo, *, scale):
    q = jnp.einsum('bnd,hdk->bhnk', x, wq_t) * scale
    k = jnp.einsum('bnd,hdk->bhnk', x, wk_t)
    v = jnp.einsum('bnd,hdk->bhnk', x, wv_t)
    dots = jnp.einsum('bhnk,bhmk->bhnm', q, k)
    attn = jax.nn.softmax(dots, axis=-1)
    out = jnp.einsum('bhnm,bhmk->bhnk', attn, v)
    return jnp.einsum('bhnk,hkd->bnd', out, wo_t) + bo


if __name__ == "__main__":
    # Module defaults: heads=8, dim_head=64 -> inner_dim=512; small TPU-aligned
    # batch/seq/dim: B=2, N=128, dim=128.
    B, N, DIM, HEADS, DIM_HEAD = 2, 128, 128, 8, 64
    INNER = HEADS * DIM_HEAD
    SCALE = DIM_HEAD ** -0.5

    key = jax.random.PRNGKey(0)
    k_x, k_qkv, k_wo, k_bo = jax.random.split(key, 4)

    x = jax.random.normal(k_x, (B, N, DIM), dtype=jnp.float32)

    # PyTorch-layout parameters:
    #   to_qkv.weight : [3*inner_dim, dim]   (bias=False)
    #   to_out[0].weight : [dim, inner_dim], to_out[0].bias : [dim]
    w_qkv = jax.random.normal(k_qkv, (3 * INNER, DIM), dtype=jnp.float32) * (DIM ** -0.5)
    w_out = jax.random.normal(k_wo, (DIM, INNER), dtype=jnp.float32) * (INNER ** -0.5)
    b_out = jax.random.normal(k_bo, (DIM,), dtype=jnp.float32) * 0.01

    # Re-layout for the kernel:  y = x @ W^T  ->  store W^T, split per head.
    w_qkv_t = w_qkv.T                                                    # [dim, 3*inner]
    wq_t = w_qkv_t[:, 0 * INNER:1 * INNER].reshape(DIM, HEADS, DIM_HEAD).transpose(1, 0, 2)
    wk_t = w_qkv_t[:, 1 * INNER:2 * INNER].reshape(DIM, HEADS, DIM_HEAD).transpose(1, 0, 2)
    wv_t = w_qkv_t[:, 2 * INNER:3 * INNER].reshape(DIM, HEADS, DIM_HEAD).transpose(1, 0, 2)
    wo_t = w_out.T.reshape(HEADS, DIM_HEAD, DIM)                         # [H, dh, dim]
    bo = b_out.reshape(1, DIM)

    out = attention_forward(x, wq_t, wk_t, wv_t, wo_t, bo, scale=SCALE)
    jax.block_until_ready(out)

    ref = attention_ref(x, wq_t, wk_t, wv_t, wo_t, bo, scale=SCALE)
    assert out.shape == (B, N, DIM)
    assert jnp.allclose(out, ref, atol=1e-4, rtol=1e-4), "mismatch vs JAX reference"

    print("KERNEL_OK")
</pallas_src>

<mosaic_0001>
module attributes {stable_mosaic.version = 11 : i64} {
  func.func @attention_kernel(%arg0: i32, %arg1: i32, %arg2: memref<1x128x128xf32, #tpu.memory_space<vmem>>, %arg3: memref<1x128x64xf32, #tpu.memory_space<vmem>>, %arg4: memref<1x128x64xf32, #tpu.memory_space<vmem>>, %arg5: memref<1x128x64xf32, #tpu.memory_space<vmem>>, %arg6: memref<1x64x128xf32, #tpu.memory_space<vmem>>, %arg7: memref<1x128xf32, #tpu.memory_space<vmem>>, %arg8: memref<1x128x128xf32, #tpu.memory_space<vmem>>, %arg9: memref<128x128xf32, #tpu.memory_space<vmem>>) attributes {dimension_semantics = [#tpu.dimension_semantics<parallel>, #tpu.dimension_semantics<arbitrary>], iteration_bounds = array<i64: 2, 8>, scalar_prefetch = 0 : i64, scratch_operands = 1 : i64, tpu.core_type = #tpu.core_type<tc>, window_params = [{transform_indices = @transform_0, window_bounds = array<i64: 1, 128, 128>}, {transform_indices = @transform_1, window_bounds = array<i64: 1, 128, 64>}, {transform_indices = @transform_2, window_bounds = array<i64: 1, 128, 64>}, {transform_indices = @transform_3, window_bounds = array<i64: 1, 128, 64>}, {transform_indices = @transform_4, window_bounds = array<i64: 1, 64, 128>}, {pipeline_mode = #tpu.pipeline_mode<synchronous>, transform_indices = @transform_5, window_bounds = array<i64: 1, 128>}, {transform_indices = @transform_6, window_bounds = array<i64: 1, 128, 128>}]} {
    %c0 = arith.constant 0 : index
    %c0_0 = arith.constant 0 : index
    %c0_1 = arith.constant 0 : index
    %0 = vector.load %arg2[%c0, %c0_0, %c0_1] : memref<1x128x128xf32, #tpu.memory_space<vmem>>, vector<1x128x128xf32>
    %1 = vector.shape_cast %0 : vector<1x128x128xf32> to vector<128x128xf32>
    %c0_2 = arith.constant 0 : index
    %c0_3 = arith.constant 0 : index
    %c0_4 = arith.constant 0 : index
    %2 = vector.load %arg3[%c0_2, %c0_3, %c0_4] : memref<1x128x64xf32, #tpu.memory_space<vmem>>, vector<1x128x64xf32>
    %3 = vector.shape_cast %2 : vector<1x128x64xf32> to vector<128x64xf32>
    %cst = arith.constant dense<0.000000e+00> : vector<128x64xf32>
    %4 = tpu.matmul %1, %3, %cst {dimension_numbers = #tpu.dot_dimension_numbers<[1], [0], [0], [1], [0, 0, 1, 1], [], []>} : vector<128x128xf32>, vector<128x64xf32>, vector<128x64xf32> -> vector<128x64xf32>
    %cst_5 = arith.constant 1.250000e-01 : f32
    %5 = vector.broadcast %cst_5 : f32 to vector<128x64xf32>
    %6 = arith.mulf %4, %5 : vector<128x64xf32>
    %c0_6 = arith.constant 0 : index
    %c0_7 = arith.constant 0 : index
    %c0_8 = arith.constant 0 : index
    %7 = vector.load %arg4[%c0_6, %c0_7, %c0_8] : memref<1x128x64xf32, #tpu.memory_space<vmem>>, vector<1x128x64xf32>
    %8 = vector.shape_cast %7 : vector<1x128x64xf32> to vector<128x64xf32>
    %cst_9 = arith.constant dense<0.000000e+00> : vector<128x64xf32>
    %9 = tpu.matmul %1, %8, %cst_9 {dimension_numbers = #tpu.dot_dimension_numbers<[1], [0], [0], [1], [0, 0, 1, 1], [], []>} : vector<128x128xf32>, vector<128x64xf32>, vector<128x64xf32> -> vector<128x64xf32>
    %c0_10 = arith.constant 0 : index
    %c0_11 = arith.constant 0 : index
    %c0_12 = arith.constant 0 : index
    %10 = vector.load %arg5[%c0_10, %c0_11, %c0_12] : memref<1x128x64xf32, #tpu.memory_space<vmem>>, vector<1x128x64xf32>
    %11 = vector.shape_cast %10 : vector<1x128x64xf32> to vector<128x64xf32>
    %cst_13 = arith.constant dense<0.000000e+00> : vector<128x64xf32>
    %12 = tpu.matmul %1, %11, %cst_13 {dimension_numbers = #tpu.dot_dimension_numbers<[1], [0], [0], [1], [0, 0, 1, 1], [], []>} : vector<128x128xf32>, vector<128x64xf32>, vector<128x64xf32> -> vector<128x64xf32>
    %cst_14 = arith.constant dense<0.000000e+00> : vector<128x128xf32>
    %13 = tpu.matmul %6, %9, %cst_14 {dimension_numbers = #tpu.dot_dimension_numbers<[1], [1], [0], [0], [0, 0, 1, 0], [], []>} : vector<128x64xf32>, vector<128x64xf32>, vector<128x128xf32> -> vector<128x128xf32>
    %cst_15 = arith.constant dense<0xFF800000> : vector<128xf32>
    %14 = vector.multi_reduction <maximumf>, %13, %cst_15 [1] : vector<128x128xf32> to vector<128xf32>
    %15 = vector.shape_cast %14 : vector<128xf32> to vector<128x1xf32>
    %16 = vector.broadcast %15 : vector<128x1xf32> to vector<128x128xf32>
    %17 = arith.subf %13, %16 : vector<128x128xf32>
    %18 = math.exp %17 : vector<128x128xf32>
    %cst_16 = arith.constant dense<0.000000e+00> : vector<128xf32>
    %19 = vector.multi_reduction <add>, %18, %cst_16 [1] : vector<128x128xf32> to vector<128xf32>
    %20 = vector.shape_cast %19 : vector<128xf32> to vector<128x1xf32>
    %21 = tpu.reciprocal %20 : vector<128x1xf32> -> vector<128x1xf32>
    %22 = vector.broadcast %21 : vector<128x1xf32> to vector<128x128xf32>
    %23 = arith.mulf %18, %22 : vector<128x128xf32>
    %cst_17 = arith.constant dense<0.000000e+00> : vector<128x64xf32>
    %24 = tpu.matmul %23, %12, %cst_17 {dimension_numbers = #tpu.dot_dimension_numbers<[1], [0], [0], [1], [0, 0, 1, 1], [], []>} : vector<128x128xf32>, vector<128x64xf32>, vector<128x64xf32> -> vector<128x64xf32>
    %c0_18 = arith.constant 0 : index
    %c0_19 = arith.constant 0 : index
    %c0_20 = arith.constant 0 : index
    %25 = vector.load %arg6[%c0_18, %c0_19, %c0_20] : memref<1x64x128xf32, #tpu.memory_space<vmem>>, vector<1x64x128xf32>
    %26 = vector.shape_cast %25 : vector<1x64x128xf32> to vector<64x128xf32>
    %cst_21 = arith.constant dense<0.000000e+00> : vector<128x128xf32>
    %27 = tpu.matmul %24, %26, %cst_21 {dimension_numbers = #tpu.dot_dimension_numbers<[1], [0], [0], [1], [0, 0, 1, 1], [], []>} : vector<128x64xf32>, vector<64x128xf32>, vector<128x128xf32> -> vector<128x128xf32>
    %c0_i32 = arith.constant 0 : i32
    %28 = arith.cmpi eq, %arg1, %c0_i32 : i32
    %29 = arith.extui %28 : i1 to i32
    %c0_i32_22 = arith.constant 0 : i32
    %30 = arith.cmpi ne, %29, %c0_i32_22 : i32
    scf.if %30 {
      %cst_28 = arith.constant 0.000000e+00 : f32
      %37 = vector.broadcast %cst_28 : f32 to vector<128x128xf32>
      %c0_29 = arith.constant 0 : index
      %c0_30 = arith.constant 0 : index
      %38 = vector.load %arg9[%c0_29, %c0_30] : memref<128x128xf32, #tpu.memory_space<vmem>>, vector<128x128xf32>
      tpu.vector_store %arg9[%c0_29, %c0_30], %37 {strides = array<i32>} : memref<128x128xf32, #tpu.memory_space<vmem>>, vector<128x128xf32>,
    } else {
    }
    %c0_23 = arith.constant 0 : index
    %c0_24 = arith.constant 0 : index
    %31 = vector.load %arg9[%c0_23, %c0_24] : memref<128x128xf32, #tpu.memory_space<vmem>>, vector<128x128xf32>
    %32 = arith.addf %31, %27 : vector<128x128xf32>
    %c0_25 = arith.constant 0 : index
    %c0_26 = arith.constant 0 : index
    %33 = vector.load %arg9[%c0_25, %c0_26] : memref<128x128xf32, #tpu.memory_space<vmem>>, vector<128x128xf32>
    tpu.vector_store %arg9[%c0_25, %c0_26], %32 {strides = array<i32>} : memref<128x128xf32, #tpu.memory_space<vmem>>, vector<128x128xf32>,
    %c7_i32 = arith.constant 7 : i32
    %34 = arith.cmpi eq, %arg1, %c7_i32 : i32
    %35 = arith.extui %34 : i1 to i32
    %c0_i32_27 = arith.constant 0 : i32
    %36 = arith.cmpi ne, %35, %c0_i32_27 : i32
    scf.if %36 {
      %c0_28 = arith.constant 0 : index
      %c0_29 = arith.constant 0 : index
      %37 = vector.load %arg9[%c0_28, %c0_29] : memref<128x128xf32, #tpu.memory_space<vmem>>, vector<128x128xf32>
      %c0_30 = arith.constant 0 : index
      %c0_31 = arith.constant 0 : index
      %38 = vector.load %arg7[%c0_30, %c0_31] : memref<1x128xf32, #tpu.memory_space<vmem>>, vector<1x128xf32>
      %39 = vector.broadcast %38 : vector<1x128xf32> to vector<128x128xf32>
      %40 = arith.addf %37, %39 : vector<128x128xf32>
      %c0_32 = arith.constant 0 : index
      %c0_33 = arith.constant 0 : index
      %c0_34 = arith.constant 0 : index
      %41 = vector.load %arg8[%c0_32, %c0_33, %c0_34] : memref<1x128x128xf32, #tpu.memory_space<vmem>>, vector<1x128x128xf32>
      %42 = vector.shape_cast %41 : vector<1x128x128xf32> to vector<128x128xf32>
      %43 = vector.shape_cast %40 : vector<128x128xf32> to vector<1x128x128xf32>
      tpu.vector_store %arg8[%c0_32, %c0_33, %c0_34], %43 {strides = array<i32>} : memref<1x128x128xf32, #tpu.memory_space<vmem>>, vector<1x128x128xf32>,
    } else {
    }
    return
  }
  func.func @transform_0(%arg0: i32, %arg1: i32) -> (i32, i32, i32) {
    %c0_i32 = arith.constant 0 : i32
    %c0_i32_0 = arith.constant 0 : i32
    %c0_i32_1 = arith.constant 0 : i32
    return %arg0, %c0_i32, %c0_i32_0 : i32, i32, i32
  }
  func.func @transform_1(%arg0: i32, %arg1: i32) -> (i32, i32, i32) {
    %c0_i32 = arith.constant 0 : i32
    %c0_i32_0 = arith.constant 0 : i32
    %c0_i32_1 = arith.constant 0 : i32
    return %arg1, %c0_i32, %c0_i32_0 : i32, i32, i32
  }
  func.func @transform_2(%arg0: i32, %arg1: i32) -> (i32, i32, i32) {
    %c0_i32 = arith.constant 0 : i32
    %c0_i32_0 = arith.constant 0 : i32
    %c0_i32_1 = arith.constant 0 : i32
    return %arg1, %c0_i32, %c0_i32_0 : i32, i32, i32
  }
  func.func @transform_3(%arg0: i32, %arg1: i32) -> (i32, i32, i32) {
    %c0_i32 = arith.constant 0 : i32
    %c0_i32_0 = arith.constant 0 : i32
    %c0_i32_1 = arith.constant 0 : i32
    return %arg1, %c0_i32, %c0_i32_0 : i32, i32, i32
  }
  func.func @transform_4(%arg0: i32, %arg1: i32) -> (i32, i32, i32) {
    %c0_i32 = arith.constant 0 : i32
    %c0_i32_0 = arith.constant 0 : i32
    %c0_i32_1 = arith.constant 0 : i32
    return %arg1, %c0_i32, %c0_i32_0 : i32, i32, i32
  }
  func.func @transform_5(%arg0: i32, %arg1: i32) -> (i32, i32) {
    %c0_i32 = arith.constant 0 : i32
    %c0_i32_0 = arith.constant 0 : i32
    %c0_i32_1 = arith.constant 0 : i32
    return %c0_i32, %c0_i32_0 : i32, i32
  }
  func.func @transform_6(%arg0: i32, %arg1: i32) -> (i32, i32, i32) {
    %c0_i32 = arith.constant 0 : i32
    %c0_i32_0 = arith.constant 0 : i32
    %c0_i32_1 = arith.constant 0 : i32
    return %arg0, %c0_i32, %c0_i32_0 : i32, i32, i32
  }
}

</mosaic_0001>

<llo_original>
// kernel: tpu_custom_call.1
$region0: #{tpu_custom_call.1}
  #allocation0 [shape = 'u32[]', space=smem, size = 0x4, offset = 0x4, fixed_abs, tag = 'smem constant byte address 0x4 - core index']
  #allocation1 [shape = 'u32[72,128]{1,0:T(1,128)}', space=vmem, size = 0x9000, scoped, tag = 'internal scratch']
  #allocation2 [shape = 'f32[128,128]{1,0:T(8,128)}', space=vmem, size = 0x10000, scoped, tag = 'scratch operand']
  %s0 = inlined_call_operand.vmem [shape: f32[2,128,128], index: 0, kind: input, shape index: {}]
  %s1 = inlined_call_operand.vmem [shape: f32[8,128,64], index: 1, kind: input, shape index: {}]
  %s2 = inlined_call_operand.vmem [shape: f32[8,128,64], index: 2, kind: input, shape index: {}]
  %s3 = inlined_call_operand.vmem [shape: f32[8,128,64], index: 3, kind: input, shape index: {}]
  %s4 = inlined_call_operand.vmem [shape: f32[8,64,128], index: 4, kind: input, shape index: {}]
  %s5 = inlined_call_operand.vmem [shape: f32[1,128], index: 5, kind: input, shape index: {}]
  %s6 = inlined_call_operand.hbm [shape: f32[2,128,128], index: 6, kind: output, shape index: {}]
  %s7 = sld [smem:[#allocation0]]
  $region65: #{tpu_custom_call.1} parent=0
    _
  %s9 = ssub.s32 1, %s7
  %s10 = scalar_select 0, %s9, %s7
  $region1: #{tpu_custom_call.1} parent=0
    #allocation3 [shape = 'u8[131072]{0}', space=vmem, size = 0x20000, scoped, tag = 'output window, operand 0']
    #allocation4 [shape = 's32[2]{0}', space=sflag, size = 0x8, scoped, tag = 'scoped memory for tpu_custom_call.1']
    %11 = vsyncpa [#allocation4], 0
    %s12 = scalar_lea.sflag [#allocation4], 1
    %13 = vsyncpa %s12, 0
    loop: start=0, step=1, limit=18
    $region2: #{tpu_custom_call.1} parent=1 // loop_pre_header
      _
    $region3: #{tpu_custom_call.1} parent=1 // loop_header
      %s15 = sphi 0, %s19
      %p16 = scmp.ge.s32.totalorder %s15, 18
      %s22 = sphi 0, %s34
      %s23 = sphi 0, %s30
      %s24 = sphi 0, %s22
      %s25 = sphi 0, %s23
      %s26 = sphi 0, %s24
      %s27 = sphi 0, %s25
      %s37 = sphi 0, %s39
      %s40 = sphi 0, %s37
      %s41 = sphi 0, %s40
      %s57 = sphi 0, %s41
      %s63 = sphi 0, %s65
      %s66 = sphi 0, %s63
      %s67 = sphi 0, %s66
      %s83 = sphi 0, %s67
      %s89 = sphi 0, %s91
      %s92 = sphi 0, %s89
      %s93 = sphi 0, %s92
      %s109 = sphi 0, %s93
      %s115 = sphi 0, %s117
      %s118 = sphi 0, %s115
      %s119 = sphi 0, %s118
      %s135 = sphi 0, %s119
      %s141 = sphi 0, %s143
      %s144 = sphi 0, %s141
      %s145 = sphi 0, %s144
      %s161 = sphi 0, %s145
      %s165 = sphi 0, %s165
      %s167 = sphi 0, %s165
      %s168 = sphi 0, %s167
      %s182 = sphi 0, %s168
      %s188 = sphi 0, %s190
      %s191 = sphi 0, %s188
      %s192 = sphi 0, %s191
      %s208 = sphi 0, %s192
    $region4: #{tpu_custom_call.1} parent=1 // loop_header_branch
      %18 = sbr.rel (%p16) target = $region8
    $region5: #{tpu_custom_call.1} parent=1 // loop_body
      %s20 = ssub.s32 %s15, 1
      %s21 = ssub.s32 %s15, 2
      %s28 = sadd.s32 1, %s23
      %p29 = scmp.ge.s32.totalorder %s28, 8
      %s30 = scalar_select %p29, 0, %s28
      %s31 = sadd.s32 1, %s22
      %s32 = scalar_select %p29, %s31, %s22
      %p33 = scmp.ge.s32.totalorder %s32, 2
      %s34 = scalar_select %p33, 0, %s32
      %s35 = ssub.s32 %s22, %s34
      %p36 = scmp.eq.s32.totalorder %s35, 0
      %s38 = sadd.s32 %s37, 1
      %s39 = scalar_select %p36, %s37, %s38
      %p42 = pneg %p36
      %p43 = scmp.eq.s32.totalorder %s15, 15
      %p44 = por %p42, %p43
      %p45 = scmp.ne.s32.totalorder %s37, %s40
      %p46 = scmp.eq.s32.totalorder %s15, 0
      %p47 = por %p45, %p46
      %p48 = scmp.ne.s32.totalorder %s37, %s40
      %p49 = scmp.eq.s32.totalorder %s20, 15
      %p50 = por %p48, %p49
      %p51 = scmp.ne.s32.totalorder %s40, %s41
      %p52 = scmp.eq.s32.totalorder %s20, 0
      %p53 = por %p51, %p52
      %p54 = scmp.ne.s32.totalorder %s40, %s41
      %p55 = scmp.eq.s32.totalorder %s21, 15
      %p56 = por %p54, %p55
      %p58 = scmp.ne.s32.totalorder %s41, %s57
      %p59 = scmp.eq.s32.totalorder %s21, 0
      %p60 = por %p58, %p59
      %s61 = ssub.s32 %s23, %s30
      %p62 = scmp.eq.s32.totalorder %s61, 0
      %s64 = sadd.s32 %s63, 1
      %s65 = scalar_select %p62, %s63, %s64
      %p68 = pneg %p62
      %p69 = scmp.eq.s32.totalorder %s15, 15
      %p70 = por %p68, %p69
      %p71 = scmp.ne.s32.totalorder %s63, %s66
      %p72 = scmp.eq.s32.totalorder %s15, 0
      %p73 = por %p71, %p72
      %p74 = scmp.ne.s32.totalorder %s63, %s66
      %p75 = scmp.eq.s32.totalorder %s20, 15
      %p76 = por %p74, %p75
      %p77 = scmp.ne.s32.totalorder %s66, %s67
      %p78 = scmp.eq.s32.totalorder %s20, 0
      %p79 = por %p77, %p78
      %p80 = scmp.ne.s32.totalorder %s66, %s67
      %p81 = scmp.eq.s32.totalorder %s21, 15
      %p82 = por %p80, %p81
      %p84 = scmp.ne.s32.totalorder %s67, %s83
      %p85 = scmp.eq.s32.totalorder %s21, 0
      %p86 = por %p84, %p85
      %s87 = ssub.s32 %s23, %s30
      %p88 = scmp.eq.s32.totalorder %s87, 0
      %s90 = sadd.s32 %s89, 1
      %s91 = scalar_select %p88, %s89, %s90
      %p94 = pneg %p88
      %p95 = scmp.eq.s32.totalorder %s15, 15
      %p96 = por %p94, %p95
      %p97 = scmp.ne.s32.totalorder %s89, %s92
      %p98 = scmp.eq.s32.totalorder %s15, 0
      %p99 = por %p97, %p98
      %p100 = scmp.ne.s32.totalorder %s89, %s92
      %p101 = scmp.eq.s32.totalorder %s20, 15
      %p102 = por %p100, %p101
      %p103 = scmp.ne.s32.totalorder %s92, %s93
      %p104 = scmp.eq.s32.totalorder %s20, 0
      %p105 = por %p103, %p104
      %p106 = scmp.ne.s32.totalorder %s92, %s93
      %p107 = scmp.eq.s32.totalorder %s21, 15
      %p108 = por %p106, %p107
      %p110 = scmp.ne.s32.totalorder %s93, %s109
      %p111 = scmp.eq.s32.totalorder %s21, 0
      %p112 = por %p110, %p111
      %s113 = ssub.s32 %s23, %s30
      %p114 = scmp.eq.s32.totalorder %s113, 0
      %s116 = sadd.s32 %s115, 1
      %s117 = scalar_select %p114, %s115, %s116
      %p120 = pneg %p114
      %p121 = scmp.eq.s32.totalorder %s15, 15
      %p122 = por %p120, %p121
      %p123 = scmp.ne.s32.totalorder %s115, %s118
      %p124 = scmp.eq.s32.totalorder %s15, 0
      %p125 = por %p123, %p124
      %p126 = scmp.ne.s32.totalorder %s115, %s118
      %p127 = scmp.eq.s32.totalorder %s20, 15
      %p128 = por %p126, %p127
      %p129 = scmp.ne.s32.totalorder %s118, %s119
      %p130 = scmp.eq.s32.totalorder %s20, 0
      %p131 = por %p129, %p130
      %p132 = scmp.ne.s32.totalorder %s118, %s119
      %p133 = scmp.eq.s32.totalorder %s21, 15
      %p134 = por %p132, %p133
      %p136 = scmp.ne.s32.totalorder %s119, %s135
      %p137 = scmp.eq.s32.totalorder %s21, 0
      %p138 = por %p136, %p137
      %s139 = ssub.s32 %s23, %s30
      %p140 = scmp.eq.s32.totalorder %s139, 0
      %s142 = sadd.s32 %s141, 1
      %s143 = scalar_select %p140, %s141, %s142
      %p146 = pneg %p140
      %p147 = scmp.eq.s32.totalorder %s15, 15
      %p148 = por %p146, %p147
      %p149 = scmp.ne.s32.totalorder %s141, %s144
      %p150 = scmp.eq.s32.totalorder %s15, 0
      %p151 = por %p149, %p150
      %p152 = scmp.ne.s32.totalorder %s141, %s144
      %p153 = scmp.eq.s32.totalorder %s20, 15
      %p154 = por %p152, %p153
      %p155 = scmp.ne.s32.totalorder %s144, %s145
      %p156 = scmp.eq.s32.totalorder %s20, 0
      %p157 = por %p155, %p156
      %p158 = scmp.ne.s32.totalorder %s144, %s145
      %p159 = scmp.eq.s32.totalorder %s21, 15
      %p160 = por %p158, %p159
      %p162 = scmp.ne.s32.totalorder %s145, %s161
      %p163 = scmp.eq.s32.totalorder %s21, 0
      %p164 = por %p162, %p163
      %s166 = sadd.s32 %s165, 1
      %p169 = scmp.eq.s32.totalorder %s15, 15
      %p170 = scmp.ne.s32.totalorder %s165, %s167
      %p171 = scmp.eq.s32.totalorder %s15, 0
      %p172 = por %p170, %p171
      %p173 = scmp.ne.s32.totalorder %s165, %s167
      %p174 = scmp.eq.s32.totalorder %s20, 15
      %p175 = por %p173, %p174
      %p176 = scmp.ne.s32.totalorder %s167, %s168
      %p177 = scmp.eq.s32.totalorder %s20, 0
      %p178 = por %p176, %p177
      %p179 = scmp.ne.s32.totalorder %s167, %s168
      %p180 = scmp.eq.s32.totalorder %s21, 15
      %p181 = por %p179, %p180
      %p183 = scmp.ne.s32.totalorder %s168, %s182
      %p184 = scmp.eq.s32.totalorder %s21, 0
      %p185 = por %p183, %p184
      %s186 = ssub.s32 %s22, %s34
      %p187 = scmp.eq.s32.totalorder %s186, 0
      %s189 = sadd.s32 %s188, 1
      %s190 = scalar_select %p187, %s188, %s189
      %p193 = pneg %p187
      %p194 = scmp.eq.s32.totalorder %s15, 15
      %p195 = por %p193, %p194
      %p196 = scmp.ne.s32.totalorder %s188, %s191
      %p197 = scmp.eq.s32.totalorder %s15, 0
      %p198 = por %p196, %p197
      %p199 = scmp.ne.s32.totalorder %s188, %s191
      %p200 = scmp.eq.s32.totalorder %s20, 15
      %p201 = por %p199, %p200
      %p202 = scmp.ne.s32.totalorder %s191, %s192
      %p203 = scmp.eq.s32.totalorder %s20, 0
      %p204 = por %p202, %p203
      %p205 = scmp.ne.s32.totalorder %s191, %s192
      %p206 = scmp.eq.s32.totalorder %s21, 15
      %p207 = por %p205, %p206
      %p209 = scmp.ne.s32.totalorder %s192, %s208
      %p210 = scmp.eq.s32.totalorder %s21, 0
      %p211 = por %p209, %p210
      %p212 = scmp.le.s32.totalorder 1, %s15
      %p213 = scmp.lt.s32.totalorder %s15, 17
      %p214 = pnand %p212, %p213
      %p215 = pneg %p214
      // Predicated region
      $region9: #{tpu_custom_call.1} parent=5 // pred_check
        _
      $region10: #{tpu_custom_call.1} parent=5 // pred_check_branch
        %217 = sbr.rel (%p214) target = $region12
      $region11: #{tpu_custom_call.1} parent=5 // pred_region
        %s218 = ssub.s32 %s15, 1
        // Predicated region
        $region13: #{tpu_custom_call.1} parent=11 // pred_check
          %p219 = pneg %p178
        $region14: #{tpu_custom_call.1} parent=11 // pred_check_branch
          %221 = sbr.rel (%p219) target = $region16
        $region15: #{tpu_custom_call.1} parent=11 // pred_region
          _
        $region16: #{tpu_custom_call.1} parent=11 // pred_fallthru
          _
      $region12: #{tpu_custom_call.1} parent=5 // pred_fallthru
        _
      %p222 = scmp.lt.s32.totalorder %s15, 16
      // Predicated region
      $region17: #{tpu_custom_call.1} parent=5 // pred_check
        %p223 = pneg %p222
      $region18: #{tpu_custom_call.1} parent=5 // pred_check_branch
        %225 = sbr.rel (%p223) target = $region20
      $region19: #{tpu_custom_call.1} parent=5 // pred_region
        // Predicated region
        $region21: #{tpu_custom_call.1} parent=19 // pred_check
          %p226 = pneg %p47
        $region22: #{tpu_custom_call.1} parent=19 // pred_check_branch
          %228 = sbr.rel (%p226) target = $region24
        $region23: #{tpu_custom_call.1} parent=19 // pred_region
          %p229 = scmp.lt.s32.totalorder %s22, 1
          %s230 = scalar_select %p229, %s22, 1
          %s231 = smul.addr %s230, 16
          %s232 = smul.addr %s231, 8
          %s233 = scalar_lea.vmem %s0, %s232
        $region24: #{tpu_custom_call.1} parent=19 // pred_fallthru
          _
        // Predicated region
        $region25: #{tpu_custom_call.1} parent=19 // pred_check
          %p234 = pneg %p73
        $region26: #{tpu_custom_call.1} parent=19 // pred_check_branch
          %236 = sbr.rel (%p234) target = $region28
        $region27: #{tpu_custom_call.1} parent=19 // pred_region
          %p237 = scmp.lt.s32.totalorder %s23, 7
          %s238 = scalar_select %p237, %s23, 7
          %s239 = smul.addr %s238, 16
          %s240 = smul.addr %s239, 8
          %s241 = scalar_lea.vmem %s1, %s240
        $region28: #{tpu_custom_call.1} parent=19 // pred_fallthru
          _
        // Predicated region
        $region29: #{tpu_custom_call.1} parent=19 // pred_check
          %p242 = pneg %p99
        $region30: #{tpu_custom_call.1} parent=19 // pred_check_branch
          %244 = sbr.rel (%p242) target = $region32
        $region31: #{tpu_custom_call.1} parent=19 // pred_region
          %p245 = scmp.lt.s32.totalorder %s23, 7
          %s246 = scalar_select %p245, %s23, 7
          %s247 = smul.addr %s246, 16
          %s248 = smul.addr %s247, 8
          %s249 = scalar_lea.vmem %s2, %s248
        $region32: #{tpu_custom_call.1} parent=19 // pred_fallthru
          _
        // Predicated region
        $region33: #{tpu_custom_call.1} parent=19 // pred_check
          %p250 = pneg %p125
        $region34: #{tpu_custom_call.1} parent=19 // pred_check_branch
          %252 = sbr.rel (%p250) target = $region36
        $region35: #{tpu_custom_call.1} parent=19 // pred_region
          %p253 = scmp.lt.s32.totalorder %s23, 7
          %s254 = scalar_select %p253, %s23, 7
          %s255 = smul.addr %s254, 16
          %s256 = smul.addr %s255, 8
          %s257 = scalar_lea.vmem %s3, %s256
        $region36: #{tpu_custom_call.1} parent=19 // pred_fallthru
          _
        // Predicated region
        $region37: #{tpu_custom_call.1} parent=19 // pred_check
          %p258 = pneg %p151
        $region38: #{tpu_custom_call.1} parent=19 // pred_check_branch
          %260 = sbr.rel (%p258) target = $region40
        $region39: #{tpu_custom_call.1} parent=19 // pred_region
          %p261 = scmp.lt.s32.totalorder %s23, 7
          %s262 = scalar_select %p261, %s23, 7
          %s263 = smul.addr %s262, 8
          %s264 = smul.addr %s263, 8
          %s265 = scalar_lea.vmem %s4, %s264
        $region40: #{tpu_custom_call.1} parent=19 // pred_fallthru
          _
      $region20: #{tpu_custom_call.1} parent=5 // pred_fallthru
        _
      %p266 = scmp.le.s32.totalorder 1, %s15
      %p267 = scmp.lt.s32.totalorder %s15, 17
      %p268 = pnand %p266, %p267
      %p269 = pneg %p268
      // Predicated region
      $region41: #{tpu_custom_call.1} parent=5 // pred_check
        _
      $region42: #{tpu_custom_call.1} parent=5 // pred_check_branch
        %271 = sbr.rel (%p268) target = $region44
      $region43: #{tpu_custom_call.1} parent=5 // pred_region
        %s272 = ssub.s32 %s15, 1
        %p273 = scmp.lt.s32.totalorder %s24, 1
        %s274 = scalar_select %p273, %s24, 1
        %s275 = smul.addr %s274, 16
        %s276 = smul.addr %s275, 8
        %s277 = scalar_lea.vmem %s0, %s276
        %p278 = pneg %p53
        %p279 = pneg %p50
        %p280 = scmp.lt.s32.totalorder %s25, 7
        %s281 = scalar_select %p280, %s25, 7
        %s282 = smul.addr %s281, 16
        %s283 = smul.addr %s282, 8
        %s284 = scalar_lea.vmem %s1, %s283
        %p285 = pneg %p79
        %p286 = pneg %p76
        %p287 = scmp.lt.s32.totalorder %s25, 7
        %s288 = scalar_select %p287, %s25, 7
        %s289 = smul.addr %s288, 16
        %s290 = smul.addr %s289, 8
        %s291 = scalar_lea.vmem %s2, %s290
        %p292 = pneg %p105
        %p293 = pneg %p102
        %p294 = scmp.lt.s32.totalorder %s25, 7
        %s295 = scalar_select %p294, %s25, 7
        %s296 = smul.addr %s295, 16
        %s297 = smul.addr %s296, 8
        %s298 = scalar_lea.vmem %s3, %s297
        %p299 = pneg %p131
        %p300 = pneg %p128
        %p301 = scmp.lt.s32.totalorder %s25, 7
        %s302 = scalar_select %p301, %s25, 7
        %s303 = smul.addr %s302, 8
        %s304 = smul.addr %s303, 8
        %s305 = scalar_lea.vmem %s4, %s304
        %p306 = pneg %p157
        %p307 = pneg %p154
        %p308 = pneg %p178
        %p309 = pneg %p175
        %p310 = pneg %p204
        %p311 = pneg %p201
        %s312 = sand.u32 %s191, 1
        %s313 = scalar_lea.sflag [#allocation4], %s312
        %s314 = sand.u32 %s191, 1
        %s315 = smul.addr %s314, 128
        %s316 = scalar_lea.vmem [#allocation3], %s315
        %p317 = scmp.lt.s32.totalorder %s24, 1
        %s318 = scalar_select %p317, %s24, 1
        %s319 = smul.addr %s318, 16
        %s320 = smul.addr %s319, 8
        %s321 = scalar_lea.vmem %s0, %s320
        %p322 = scmp.lt.s32.totalorder %s25, 7
        %s323 = scalar_select %p322, %s25, 7
        %s324 = smul.addr %s323, 16
        %s325 = smul.addr %s324, 8
        %s326 = scalar_lea.vmem %s1, %s325
        %p327 = scmp.lt.s32.totalorder %s25, 7
        %s328 = scalar_select %p327, %s25, 7
        %s329 = smul.addr %s328, 16
        %s330 = smul.addr %s329, 8
        %s331 = scalar_lea.vmem %s2, %s330
        %p332 = scmp.lt.s32.totalorder %s25, 7
        %s333 = scalar_select %p332, %s25, 7
        %s334 = smul.addr %s333, 16
        %s335 = smul.addr %s334, 8
        %s336 = scalar_lea.vmem %s3, %s335
        %p337 = scmp.lt.s32.totalorder %s25, 7
        %s338 = scalar_select %p337, %s25, 7
        %s339 = smul.addr %s338, 8
        %s340 = smul.addr %s339, 8
        %s341 = scalar_lea.vmem %s4, %s340
        %v342 = vld [vmem:[%s321] sm:$0xff]
        %v343 = vld [vmem:[%s321 + $0x8] sm:$0xff]
        %v344 = vld [vmem:[%s321 + $0x10] sm:$0xff]
        %v345 = vld [vmem:[%s321 + $0x18] sm:$0xff]
        %v346 = vld [vmem:[%s321 + $0x20] sm:$0xff]
        %v347 = vld [vmem:[%s321 + $0x28] sm:$0xff]
        %v348 = vld [vmem:[%s321 + $0x30] sm:$0xff]
        %v349 = vld [vmem:[%s321 + $0x38] sm:$0xff]
        %v350 = vld [vmem:[%s321 + $0x40] sm:$0xff]
        %v351 = vld [vmem:[%s321 + $0x48] sm:$0xff]
        %v352 = vld [vmem:[%s321 + $0x50] sm:$0xff]
        %v353 = vld [vmem:[%s321 + $0x58] sm:$0xff]
        %v354 = vld [vmem:[%s321 + $0x60] sm:$0xff]
        %v355 = vld [vmem:[%s321 + $0x68] sm:$0xff]
        %v356 = vld [vmem:[%s321 + $0x70] sm:$0xff]
        %v357 = vld [vmem:[%s321 + $0x78] sm:$0xff]
        %v358 = vld [vmem:[%s326] sm:$0xff]
        %v359 = vld [vmem:[%s326 + $0x8] sm:$0xff]
        %v360 = vld [vmem:[%s326 + $0x10] sm:$0xff]
        %v361 = vld [vmem:[%s326 + $0x18] sm:$0xff]
        %v362 = vld [vmem:[%s326 + $0x20] sm:$0xff]
        %v363 = vld [vmem:[%s326 + $0x28] sm:$0xff]
        %v364 = vld [vmem:[%s326 + $0x30] sm:$0xff]
        %v365 = vld [vmem:[%s326 + $0x38] sm:$0xff]
        %v366 = vld [vmem:[%s326 + $0x40] sm:$0xff]
        %v367 = vld [vmem:[%s326 + $0x48] sm:$0xff]
        %v368 = vld [vmem:[%s326 + $0x50] sm:$0xff]
        %v369 = vld [vmem:[%s326 + $0x58] sm:$0xff]
        %v370 = vld [vmem:[%s326 + $0x60] sm:$0xff]
        %v371 = vld [vmem:[%s326 + $0x68] sm:$0xff]
        %v372 = vld [vmem:[%s326 + $0x70] sm:$0xff]
        %v373 = vld [vmem:[%s326 + $0x78] sm:$0xff]
        %374 = vmatpush.msra.mxu0 %v373
        %375 = vmatpush.msra.mxu0 %v372
        %376 = vmatpush.msra.mxu0 %v371
        %377 = vmatpush.msra.mxu0 %v370
        %378 = vmatpush.msra.mxu0 %v369
        %379 = vmatpush.msra.mxu0 %v368
        %380 = vmatpush.msra.mxu0 %v367
        %381 = vmatpush.msra.mxu0 %v366
        %382 = vmatpush.msra.mxu0 %v365
        %383 = vmatpush.msra.mxu0 %v364
        %384 = vmatpush.msra.mxu0 %v363
        %385 = vmatpush.msra.mxu0 %v362
        %386 = vmatpush.msra.mxu0 %v361
        %387 = vmatpush.msra.mxu0 %v360
        %388 = vmatpush.msra.mxu0 %v359
        %389 = vmatpush.msra.mxu0 %v358
        %390 = vmatmul.f32.gmra.mxu0 %v342
        %v391 = vpop.f32.mrf.mxu0
        %v392 = vadd.f32 0.0, %v391
        %393 = vmatmul.f32.gmra.mxu0 %v343
        %v394 = vpop.f32.mrf.mxu0
        %v395 = vadd.f32 0.0, %v394
        %396 = vmatmul.f32.gmra.mxu0 %v344
        %v397 = vpop.f32.mrf.mxu0
        %v398 = vadd.f32 0.0, %v397
        %399 = vmatmul.f32.gmra.mxu0 %v345
        %v400 = vpop.f32.mrf.mxu0
        %v401 = vadd.f32 0.0, %v400
        %402 = vmatmul.f32.gmra.mxu0 %v346
        %v403 = vpop.f32.mrf.mxu0
        %v404 = vadd.f32 0.0, %v403
        %405 = vmatmul.f32.gmra.mxu0 %v347
        %v406 = vpop.f32.mrf.mxu0
        %v407 = vadd.f32 0.0, %v406
        %408 = vmatmul.f32.gmra.mxu0 %v348
        %v409 = vpop.f32.mrf.mxu0
        %v410 = vadd.f32 0.0, %v409
        %411 = vmatmul.f32.gmra.mxu0 %v349
        %v412 = vpop.f32.mrf.mxu0
        %v413 = vadd.f32 0.0, %v412
        %414 = vmatmul.f32.gmra.mxu0 %v350
        %v415 = vpop.f32.mrf.mxu0
        %v416 = vadd.f32 0.0, %v415
        %417 = vmatmul.f32.gmra.mxu0 %v351
        %v418 = vpop.f32.mrf.mxu0
        %v419 = vadd.f32 0.0, %v418
        %420 = vmatmul.f32.gmra.mxu0 %v352
        %v421 = vpop.f32.mrf.mxu0
        %v422 = vadd.f32 0.0, %v421
        %423 = vmatmul.f32.gmra.mxu0 %v353
        %v424 = vpop.f32.mrf.mxu0
        %v425 = vadd.f32 0.0, %v424
        %426 = vmatmul.f32.gmra.mxu0 %v354
        %v427 = vpop.f32.mrf.mxu0
        %v428 = vadd.f32 0.0, %v427
        %429 = vmatmul.f32.gmra.mxu0 %v355
        %v430 = vpop.f32.mrf.mxu0
        %v431 = vadd.f32 0.0, %v430
        %432 = vmatmul.f32.gmra.mxu0 %v356
        %v433 = vpop.f32.mrf.mxu0
        %v434 = vadd.f32 0.0, %v433
        %435 = vmatmul.f32.gmra.mxu0 %v357
        %v436 = vpop.f32.mrf.mxu0
        %v437 = vadd.f32 0.0, %v436
        %438 = vdwg.mxu0
        %v439 = vmul.f32 %v392, 0.125
        %v440 = vmul.f32 %v395, 0.125
        %v441 = vmul.f32 %v398, 0.125
        %v442 = vmul.f32 %v401, 0.125
        %v443 = vmul.f32 %v404, 0.125
        %v444 = vmul.f32 %v407, 0.125
        %v445 = vmul.f32 %v410, 0.125
        %v446 = vmul.f32 %v413, 0.125
        %v447 = vmul.f32 %v416, 0.125
        %v448 = vmul.f32 %v419, 0.125
        %v449 = vmul.f32 %v422, 0.125
        %v450 = vmul.f32 %v425, 0.125
        %v451 = vmul.f32 %v428, 0.125
        %v452 = vmul.f32 %v431, 0.125
        %v453 = vmul.f32 %v434, 0.125
        %v454 = vmul.f32 %v437, 0.125
        %v455 = vld [vmem:[%s331] sm:$0xff]
        %v456 = vld [vmem:[%s331 + $0x8] sm:$0xff]
        %v457 = vld [vmem:[%s331 + $0x10] sm:$0xff]
        %v458 = vld [vmem:[%s331 + $0x18] sm:$0xff]
        %v459 = vld [vmem:[%s331 + $0x20] sm:$0xff]
        %v460 = vld [vmem:[%s331 + $0x28] sm:$0xff]
        %v461 = vld [vmem:[%s331 + $0x30] sm:$0xff]
        %v462 = vld [vmem:[%s331 + $0x38] sm:$0xff]
        %v463 = vld [vmem:[%s331 + $0x40] sm:$0xff]
        %v464 = vld [vmem:[%s331 + $0x48] sm:$0xff]
        %v465 = vld [vmem:[%s331 + $0x50] sm:$0xff]
        %v466 = vld [vmem:[%s331 + $0x58] sm:$0xff]
        %v467 = vld [vmem:[%s331 + $0x60] sm:$0xff]
        %v468 = vld [vmem:[%s331 + $0x68] sm:$0xff]
        %v469 = vld [vmem:[%s331 + $0x70] sm:$0xff]
        %v470 = vld [vmem:[%s331 + $0x78] sm:$0xff]
        %471 = vmatpush.msra.mxu0 %v470
        %472 = vmatpush.msra.mxu0 %v469
        %473 = vmatpush.msra.mxu0 %v468
        %474 = vmatpush.msra.mxu0 %v467
        %475 = vmatpush.msra.mxu0 %v466
        %476 = vmatpush.msra.mxu0 %v465
        %477 = vmatpush.msra.mxu0 %v464
        %478 = vmatpush.msra.mxu0 %v463
        %479 = vmatpush.msra.mxu0 %v462
        %480 = vmatpush.msra.mxu0 %v461
        %481 = vmatpush.msra.mxu0 %v460
        %482 = vmatpush.msra.mxu0 %v459
        %483 = vmatpush.msra.mxu0 %v458
        %484 = vmatpush.msra.mxu0 %v457
        %485 = vmatpush.msra.mxu0 %v456
        %486 = vmatpush.msra.mxu0 %v455
        %487 = vmatmul.f32.gmra.mxu0 %v342
        %v488 = vpop.f32.mrf.mxu0
        %v489 = vadd.f32 0.0, %v488
        %490 = vmatmul.f32.gmra.mxu0 %v343
        %v491 = vpop.f32.mrf.mxu0
        %v492 = vadd.f32 0.0, %v491
        %493 = vmatmul.f32.gmra.mxu0 %v344
        %v494 = vpop.f32.mrf.mxu0
        %v495 = vadd.f32 0.0, %v494
        %496 = vmatmul.f32.gmra.mxu0 %v345
        %v497 = vpop.f32.mrf.mxu0
        %v498 = vadd.f32 0.0, %v497
        %499 = vmatmul.f32.gmra.mxu0 %v346
        %v500 = vpop.f32.mrf.mxu0
        %v501 = vadd.f32 0.0, %v500
        %502 = vmatmul.f32.gmra.mxu0 %v347
        %v503 = vpop.f32.mrf.mxu0
        %v504 = vadd.f32 0.0, %v503
        %505 = vmatmul.f32.gmra.mxu0 %v348
        %v506 = vpop.f32.mrf.mxu0
        %v507 = vadd.f32 0.0, %v506
        %508 = vmatmul.f32.gmra.mxu0 %v349
        %v509 = vpop.f32.mrf.mxu0
        %v510 = vadd.f32 0.0, %v509
        %511 = vmatmul.f32.gmra.mxu0 %v350
        %v512 = vpop.f32.mrf.mxu0
        %v513 = vadd.f32 0.0, %v512
        %514 = vmatmul.f32.gmra.mxu0 %v351
        %v515 = vpop.f32.mrf.mxu0
        %v516 = vadd.f32 0.0, %v515
        %517 = vmatmul.f32.gmra.mxu0 %v352
        %v518 = vpop.f32.mrf.mxu0
        %v519 = vadd.f32 0.0, %v518
        %520 = vmatmul.f32.gmra.mxu0 %v353
        %v521 = vpop.f32.mrf.mxu0
        %v522 = vadd.f32 0.0, %v521
        %523 = vmatmul.f32.gmra.mxu0 %v354
        %v524 = vpop.f32.mrf.mxu0
        %v525 = vadd.f32 0.0, %v524
        %526 = vmatmul.f32.gmra.mxu0 %v355
        %v527 = vpop.f32.mrf.mxu0
        %v528 = vadd.f32 0.0, %v527
        %529 = vmatmul.f32.gmra.mxu0 %v356
        %v530 = vpop.f32.mrf.mxu0
        %v531 = vadd.f32 0.0, %v530
        %532 = vmatmul.f32.gmra.mxu0 %v357
        %v533 = vpop.f32.mrf.mxu0
        %v534 = vadd.f32 0.0, %v533
        %535 = vdwg.mxu0
        %v536 = vld [vmem:[%s336] sm:$0xff]
        %v537 = vld [vmem:[%s336 + $0x8] sm:$0xff]
        %v538 = vld [vmem:[%s336 + $0x10] sm:$0xff]
        %v539 = vld [vmem:[%s336 + $0x18] sm:$0xff]
        %v540 = vld [vmem:[%s336 + $0x20] sm:$0xff]
        %v541 = vld [vmem:[%s336 + $0x28] sm:$0xff]
        %v542 = vld [vmem:[%s336 + $0x30] sm:$0xff]
        %v543 = vld [vmem:[%s336 + $0x38] sm:$0xff]
        %v544 = vld [vmem:[%s336 + $0x40] sm:$0xff]
        %v545 = vld [vmem:[%s336 + $0x48] sm:$0xff]
        %v546 = vld [vmem:[%s336 + $0x50] sm:$0xff]
        %v547 = vld [vmem:[%s336 + $0x58] sm:$0xff]
        %v548 = vld [vmem:[%s336 + $0x60] sm:$0xff]
        %v549 = vld [vmem:[%s336 + $0x68] sm:$0xff]
        %v550 = vld [vmem:[%s336 + $0x70] sm:$0xff]
        %v551 = vld [vmem:[%s336 + $0x78] sm:$0xff]
        %552 = vmatpush.msra.mxu0 %v551
        %553 = vmatpush.msra.mxu0 %v550
        %554 = vmatpush.msra.mxu0 %v549
        %555 = vmatpush.msra.mxu0 %v548
        %556 = vmatpush.msra.mxu0 %v547
        %557 = vmatpush.msra.mxu0 %v546
        %558 = vmatpush.msra.mxu0 %v545
        %559 = vmatpush.msra.mxu0 %v544
        %560 = vmatpush.msra.mxu0 %v543
        %561 = vmatpush.msra.mxu0 %v542
        %562 = vmatpush.msra.mxu0 %v541
        %563 = vmatpush.msra.mxu0 %v540
        %564 = vmatpush.msra.mxu0 %v539
        %565 = vmatpush.msra.mxu0 %v538
        %566 = vmatpush.msra.mxu0 %v537
        %567 = vmatpush.msra.mxu0 %v536
        %568 = vmatmul.f32.gmra.mxu0 %v342
        %v569 = vpop.f32.mrf.mxu0
        %v570 = vadd.f32 0.0, %v569
        %571 = vmatmul.f32.gmra.mxu0 %v343
        %v572 = vpop.f32.mrf.mxu0
        %v573 = vadd.f32 0.0, %v572
        %574 = vmatmul.f32.gmra.mxu0 %v344
        %v575 = vpop.f32.mrf.mxu0
        %v576 = vadd.f32 0.0, %v575
        %577 = vmatmul.f32.gmra.mxu0 %v345
        %v578 = vpop.f32.mrf.mxu0
        %v579 = vadd.f32 0.0, %v578
        %580 = vmatmul.f32.gmra.mxu0 %v346
        %v581 = vpop.f32.mrf.mxu0
        %v582 = vadd.f32 0.0, %v581
        %583 = vmatmul.f32.gmra.mxu0 %v347
        %v584 = vpop.f32.mrf.mxu0
        %v585 = vadd.f32 0.0, %v584
        %586 = vmatmul.f32.gmra.mxu0 %v348
        %v587 = vpop.f32.mrf.mxu0
        %v588 = vadd.f32 0.0, %v587
        %589 = vmatmul.f32.gmra.mxu0 %v349
        %v590 = vpop.f32.mrf.mxu0
        %v591 = vadd.f32 0.0, %v590
        %592 = vmatmul.f32.gmra.mxu0 %v350
        %v593 = vpop.f32.mrf.mxu0
        %v594 = vadd.f32 0.0, %v593
        %595 = vmatmul.f32.gmra.mxu0 %v351
        %v596 = vpop.f32.mrf.mxu0
        %v597 = vadd.f32 0.0, %v596
        %598 = vmatmul.f32.gmra.mxu0 %v352
        %v599 = vpop.f32.mrf.mxu0
        %v600 = vadd.f32 0.0, %v599
        %601 = vmatmul.f32.gmra.mxu0 %v353
        %v602 = vpop.f32.mrf.mxu0
        %v603 = vadd.f32 0.0, %v602
        %604 = vmatmul.f32.gmra.mxu0 %v354
        %v605 = vpop.f32.mrf.mxu0
        %v606 = vadd.f32 0.0, %v605
        %607 = vmatmul.f32.gmra.mxu0 %v355
        %v608 = vpop.f32.mrf.mxu0
        %v609 = vadd.f32 0.0, %v608
        %610 = vmatmul.f32.gmra.mxu0 %v356
        %v611 = vpop.f32.mrf.mxu0
        %v612 = vadd.f32 0.0, %v611
        %613 = vmatmul.f32.gmra.mxu0 %v357
        %v614 = vpop.f32.mrf.mxu0
        %v615 = vadd.f32 0.0, %v614
        %616 = vdwg.mxu0
        %vm617 = vcmask 523264
        %v619 = vsel %vm617, %v439, 0
        %v622 = vsel %vm617, %v440, 0
        %v625 = vsel %vm617, %v441, 0
        %v628 = vsel %vm617, %v442, 0
        %v631 = vsel %vm617, %v443, 0
        %v634 = vsel %vm617, %v444, 0
        %v637 = vsel %vm617, %v445, 0
        %v640 = vsel %vm617, %v446, 0
        %v643 = vsel %vm617, %v447, 0
        %v646 = vsel %vm617, %v448, 0
        %v649 = vsel %vm617, %v449, 0
        %v652 = vsel %vm617, %v450, 0
        %v655 = vsel %vm617, %v451, 0
        %v658 = vsel %vm617, %v452, 0
        %v661 = vsel %vm617, %v453, 0
        %v664 = vsel %vm617, %v454, 0
        %v667 = vsel %vm617, %v489, 0
        %v670 = vsel %vm617, %v492, 0
        %v673 = vsel %vm617, %v495, 0
        %v676 = vsel %vm617, %v498, 0
        %v679 = vsel %vm617, %v501, 0
        %v682 = vsel %vm617, %v504, 0
        %v685 = vsel %vm617, %v507, 0
        %v688 = vsel %vm617, %v510, 0
        %v691 = vsel %vm617, %v513, 0
        %v694 = vsel %vm617, %v516, 0
        %v697 = vsel %vm617, %v519, 0
        %v700 = vsel %vm617, %v522, 0
        %v703 = vsel %vm617, %v525, 0
        %v706 = vsel %vm617, %v528, 0
        %v709 = vsel %vm617, %v531, 0
        %v712 = vsel %vm617, %v534, 0
        %714 = vmatpush.xpose.msra.mxu0 %v712
        %715 = vmatpush.xpose.msra.mxu0 %v709
        %716 = vmatpush.xpose.msra.mxu0 %v706
        %717 = vmatpush.xpose.msra.mxu0 %v703
        %718 = vmatpush.xpose.msra.mxu0 %v700
        %719 = vmatpush.xpose.msra.mxu0 %v697
        %720 = vmatpush.xpose.msra.mxu0 %v694
        %721 = vmatpush.xpose.msra.mxu0 %v691
        %722 = vmatpush.xpose.msra.mxu0 %v688
        %723 = vmatpush.xpose.msra.mxu0 %v685
        %724 = vmatpush.xpose.msra.mxu0 %v682
        %725 = vmatpush.xpose.msra.mxu0 %v679
        %726 = vmatpush.xpose.msra.mxu0 %v676
        %727 = vmatpush.xpose.msra.mxu0 %v673
        %728 = vmatpush.xpose.msra.mxu0 %v670
        %729 = vmatpush.xpose.msra.mxu0 %v667
        %730 = vmatmul.f32.gmra.mxu0 %v619
        %v731 = vpop.f32.mrf.mxu0
        %v732 = vadd.f32 0.0, %v731
        %733 = vmatmul.f32.gmra.mxu0 %v622
        %v734 = vpop.f32.mrf.mxu0
        %v735 = vadd.f32 0.0, %v734
        %736 = vmatmul.f32.gmra.mxu0 %v625
        %v737 = vpop.f32.mrf.mxu0
        %v738 = vadd.f32 0.0, %v737
        %739 = vmatmul.f32.gmra.mxu0 %v628
        %v740 = vpop.f32.mrf.mxu0
        %v741 = vadd.f32 0.0, %v740
        %742 = vmatmul.f32.gmra.mxu0 %v631
        %v743 = vpop.f32.mrf.mxu0
        %v744 = vadd.f32 0.0, %v743
        %745 = vmatmul.f32.gmra.mxu0 %v634
        %v746 = vpop.f32.mrf.mxu0
        %v747 = vadd.f32 0.0, %v746
        %748 = vmatmul.f32.gmra.mxu0 %v637
        %v749 = vpop.f32.mrf.mxu0
        %v750 = vadd.f32 0.0, %v749
        %751 = vmatmul.f32.gmra.mxu0 %v640
        %v752 = vpop.f32.mrf.mxu0
        %v753 = vadd.f32 0.0, %v752
        %754 = vmatmul.f32.gmra.mxu0 %v643
        %v755 = vpop.f32.mrf.mxu0
        %v756 = vadd.f32 0.0, %v755
        %757 = vmatmul.f32.gmra.mxu0 %v646
        %v758 = vpop.f32.mrf.mxu0
        %v759 = vadd.f32 0.0, %v758
        %760 = vmatmul.f32.gmra.mxu0 %v649
        %v761 = vpop.f32.mrf.mxu0
        %v762 = vadd.f32 0.0, %v761
        %763 = vmatmul.f32.gmra.mxu0 %v652
        %v764 = vpop.f32.mrf.mxu0
        %v765 = vadd.f32 0.0, %v764
        %766 = vmatmul.f32.gmra.mxu0 %v655
        %v767 = vpop.f32.mrf.mxu0
        %v768 = vadd.f32 0.0, %v767
        %769 = vmatmul.f32.gmra.mxu0 %v658
        %v770 = vpop.f32.mrf.mxu0
        %v771 = vadd.f32 0.0, %v770
        %772 = vmatmul.f32.gmra.mxu0 %v661
        %v773 = vpop.f32.mrf.mxu0
        %v774 = vadd.f32 0.0, %v773
        %775 = vmatmul.f32.gmra.mxu0 %v664
        %v776 = vpop.f32.mrf.mxu0
        %v777 = vadd.f32 0.0, %v776
        %778 = vdwg.mxu0
        %779 = vmax.xlane.f32.xlu0 %v732
        %v780 = vpop.xlane.xlu0 %779
        %781 = vmax.xlane.f32.xlu0 %v735
        %v782 = vpop.xlane.xlu0 %781
        %783 = vmax.xlane.f32.xlu0 %v738
        %v784 = vpop.xlane.xlu0 %783
        %785 = vmax.xlane.f32.xlu0 %v741
        %v786 = vpop.xlane.xlu0 %785
        %787 = vmax.xlane.f32.xlu0 %v744
        %v788 = vpop.xlane.xlu0 %787
        %789 = vmax.xlane.f32.xlu0 %v747
        %v790 = vpop.xlane.xlu0 %789
        %791 = vmax.xlane.f32.xlu0 %v750
        %v792 = vpop.xlane.xlu0 %791
        %793 = vmax.xlane.f32.xlu0 %v753
        %v794 = vpop.xlane.xlu0 %793
        %795 = vmax.xlane.f32.xlu0 %v756
        %v796 = vpop.xlane.xlu0 %795
        %797 = vmax.xlane.f32.xlu0 %v759
        %v798 = vpop.xlane.xlu0 %797
        %799 = vmax.xlane.f32.xlu0 %v762
        %v800 = vpop.xlane.xlu0 %799
        %801 = vmax.xlane.f32.xlu0 %v765
        %v802 = vpop.xlane.xlu0 %801
        %803 = vmax.xlane.f32.xlu0 %v768
        %v804 = vpop.xlane.xlu0 %803
        %805 = vmax.xlane.f32.xlu0 %v771
        %v806 = vpop.xlane.xlu0 %805
        %807 = vmax.xlane.f32.xlu0 %v774
        %v808 = vpop.xlane.xlu0 %807
        %809 = vmax.xlane.f32.xlu0 %v777
        %v810 = vpop.xlane.xlu0 %809
        %v811 = vsub.f32 %v732, %v780
        %v812 = vsub.f32 %v735, %v782
        %v813 = vsub.f32 %v738, %v784
        %v814 = vsub.f32 %v741, %v786
        %v815 = vsub.f32 %v744, %v788
        %v816 = vsub.f32 %v747, %v790
        %v817 = vsub.f32 %v750, %v792
        %v818 = vsub.f32 %v753, %v794
        %v819 = vsub.f32 %v756, %v796
        %v820 = vsub.f32 %v759, %v798
        %v821 = vsub.f32 %v762, %v800
        %v822 = vsub.f32 %v765, %v802
        %v823 = vsub.f32 %v768, %v804
        %v824 = vsub.f32 %v771, %v806
        %v825 = vsub.f32 %v774, %v808
        %v826 = vsub.f32 %v777, %v810
        %v827 = vmul.f32 %v811, 1.442695
        %v828 = vpow.pop %v827
        %v829 = vmul.f32 %v812, 1.442695
        %v830 = vpow.pop %v829
        %v831 = vmul.f32 %v813, 1.442695
        %v832 = vpow.pop %v831
        %v833 = vmul.f32 %v814, 1.442695
        %v834 = vpow.pop %v833
        %v835 = vmul.f32 %v815, 1.442695
        %v836 = vpow.pop %v835
        %v837 = vmul.f32 %v816, 1.442695
        %v838 = vpow.pop %v837
        %v839 = vmul.f32 %v817, 1.442695
        %v840 = vpow.pop %v839
        %v841 = vmul.f32 %v818, 1.442695
        %v842 = vpow.pop %v841
        %v843 = vmul.f32 %v819, 1.442695
        %v844 = vpow.pop %v843
        %v845 = vmul.f32 %v820, 1.442695
        %v846 = vpow.pop %v845
        %v847 = vmul.f32 %v821, 1.442695
        %v848 = vpow.pop %v847
        %v849 = vmul.f32 %v822, 1.442695
        %v850 = vpow.pop %v849
        %v851 = vmul.f32 %v823, 1.442695
        %v852 = vpow.pop %v851
        %v853 = vmul.f32 %v824, 1.442695
        %v854 = vpow.pop %v853
        %v855 = vmul.f32 %v825, 1.442695
        %v856 = vpow.pop %v855
        %v857 = vmul.f32 %v826, 1.442695
        %v858 = vpow.pop %v857
        %859 = vadd.xlane.f32.xlu0 %v828
        %v860 = vpop.xlane.xlu0 %859
        %861 = vadd.xlane.f32.xlu0 %v830
        %v862 = vpop.xlane.xlu0 %861
        %863 = vadd.xlane.f32.xlu0 %v832
        %v864 = vpop.xlane.xlu0 %863
        %865 = vadd.xlane.f32.xlu0 %v834
        %v866 = vpop.xlane.xlu0 %865
        %867 = vadd.xlane.f32.xlu0 %v836
        %v868 = vpop.xlane.xlu0 %867
        %869 = vadd.xlane.f32.xlu0 %v838
        %v870 = vpop.xlane.xlu0 %869
        %871 = vadd.xlane.f32.xlu0 %v840
        %v872 = vpop.xlane.xlu0 %871
        %873 = vadd.xlane.f32.xlu0 %v842
        %v874 = vpop.xlane.xlu0 %873
        %875 = vadd.xlane.f32.xlu0 %v844
        %v876 = vpop.xlane.xlu0 %875
        %877 = vadd.xlane.f32.xlu0 %v846
        %v878 = vpop.xlane.xlu0 %877
        %879 = vadd.xlane.f32.xlu0 %v848
        %v880 = vpop.xlane.xlu0 %879
        %881 = vadd.xlane.f32.xlu0 %v850
        %v882 = vpop.xlane.xlu0 %881
        %883 = vadd.xlane.f32.xlu0 %v852
        %v884 = vpop.xlane.xlu0 %883
        %885 = vadd.xlane.f32.xlu0 %v854
        %v886 = vpop.xlane.xlu0 %885
        %887 = vadd.xlane.f32.xlu0 %v856
        %v888 = vpop.xlane.xlu0 %887
        %889 = vadd.xlane.f32.xlu0 %v858
        %v890 = vpop.xlane.xlu0 %889
        %v891 = vrcp.pop %v860
        %v892 = vmul.f32 %v860, %v891
        %v893 = vsub.f32 1.0, %v892
        %v894 = vmul.f32 %v891, %v893
        %v895 = vadd.f32 %v891, %v894
        %vm896 = vweird.f32 %v860
        %vm897 = vweird.f32 %v891
        %vm898 = vmor %vm896, %vm897
        %v899 = vsel %vm898, %v891, %v895
        %v900 = vand.u32 2147483647, %v860
        %vm901 = vcmp.eq.f32.partialorder %v900, 8.507059e+37
        %v902 = vand.u32 %v860, 2147483648
        %v903 = vor.u32 1.1754944e-38, %v902
        %v904 = vsel %vm901, %v903, %v899
        %v905 = vrcp.pop %v862
        %v906 = vmul.f32 %v862, %v905
        %v907 = vsub.f32 1.0, %v906
        %v908 = vmul.f32 %v905, %v907
        %v909 = vadd.f32 %v905, %v908
        %vm910 = vweird.f32 %v862
        %vm911 = vweird.f32 %v905
        %vm912 = vmor %vm910, %vm911
        %v913 = vsel %vm912, %v905, %v909
        %v914 = vand.u32 2147483647, %v862
        %vm915 = vcmp.eq.f32.partialorder %v914, 8.507059e+37
        %v916 = vand.u32 %v862, 2147483648
        %v917 = vor.u32 1.1754944e-38, %v916
        %v918 = vsel %vm915, %v917, %v913
        %v919 = vrcp.pop %v864
        %v920 = vmul.f32 %v864, %v919
        %v921 = vsub.f32 1.0, %v920
        %v922 = vmul.f32 %v919, %v921
        %v923 = vadd.f32 %v919, %v922
        %vm924 = vweird.f32 %v864
        %vm925 = vweird.f32 %v919
        %vm926 = vmor %vm924, %vm925
        %v927 = vsel %vm926, %v919, %v923
        %v928 = vand.u32 2147483647, %v864
        %vm929 = vcmp.eq.f32.partialorder %v928, 8.507059e+37
        %v930 = vand.u32 %v864, 2147483648
        %v931 = vor.u32 1.1754944e-38, %v930
        %v932 = vsel %vm929, %v931, %v927
        %v933 = vrcp.pop %v866
        %v934 = vmul.f32 %v866, %v933
        %v935 = vsub.f32 1.0, %v934
        %v936 = vmul.f32 %v933, %v935
        %v937 = vadd.f32 %v933, %v936
        %vm938 = vweird.f32 %v866
        %vm939 = vweird.f32 %v933
        %vm940 = vmor %vm938, %vm939
        %v941 = vsel %vm940, %v933, %v937
        %v942 = vand.u32 2147483647, %v866
        %vm943 = vcmp.eq.f32.partialorder %v942, 8.507059e+37
        %v944 = vand.u32 %v866, 2147483648
        %v945 = vor.u32 1.1754944e-38, %v944
        %v946 = vsel %vm943, %v945, %v941
        %v947 = vrcp.pop %v868
        %v948 = vmul.f32 %v868, %v947
        %v949 = vsub.f32 1.0, %v948
        %v950 = vmul.f32 %v947, %v949
        %v951 = vadd.f32 %v947, %v950
        %vm952 = vweird.f32 %v868
        %vm953 = vweird.f32 %v947
        %vm954 = vmor %vm952, %vm953
        %v955 = vsel %vm954, %v947, %v951
        %v956 = vand.u32 2147483647, %v868
        %vm957 = vcmp.eq.f32.partialorder %v956, 8.507059e+37
        %v958 = vand.u32 %v868, 2147483648
        %v959 = vor.u32 1.1754944e-38, %v958
        %v960 = vsel %vm957, %v959, %v955
        %v961 = vrcp.pop %v870
        %v962 = vmul.f32 %v870, %v961
        %v963 = vsub.f32 1.0, %v962
        %v964 = vmul.f32 %v961, %v963
        %v965 = vadd.f32 %v961, %v964
        %vm966 = vweird.f32 %v870
        %vm967 = vweird.f32 %v961
        %vm968 = vmor %vm966, %vm967
        %v969 = vsel %vm968, %v961, %v965
        %v970 = vand.u32 2147483647, %v870
        %vm971 = vcmp.eq.f32.partialorder %v970, 8.507059e+37
        %v972 = vand.u32 %v870, 2147483648
        %v973 = vor.u32 1.1754944e-38, %v972
        %v974 = vsel %vm971, %v973, %v969
        %v975 = vrcp.pop %v872
        %v976 = vmul.f32 %v872, %v975
        %v977 = vsub.f32 1.0, %v976
        %v978 = vmul.f32 %v975, %v977
        %v979 = vadd.f32 %v975, %v978
        %vm980 = vweird.f32 %v872
        %vm981 = vweird.f32 %v975
        %vm982 = vmor %vm980, %vm981
        %v983 = vsel %vm982, %v975, %v979
        %v984 = vand.u32 2147483647, %v872
        %vm985 = vcmp.eq.f32.partialorder %v984, 8.507059e+37
        %v986 = vand.u32 %v872, 2147483648
        %v987 = vor.u32 1.1754944e-38, %v986
        %v988 = vsel %vm985, %v987, %v983
        %v989 = vrcp.pop %v874
        %v990 = vmul.f32 %v874, %v989
        %v991 = vsub.f32 1.0, %v990
        %v992 = vmul.f32 %v989, %v991
        %v993 = vadd.f32 %v989, %v992
        %vm994 = vweird.f32 %v874
        %vm995 = vweird.f32 %v989
        %vm996 = vmor %vm994, %vm995
        %v997 = vsel %vm996, %v989, %v993
        %v998 = vand.u32 2147483647, %v874
        %vm999 = vcmp.eq.f32.partialorder %v998, 8.507059e+37
        %v1000 = vand.u32 %v874, 2147483648
        %v1001 = vor.u32 1.1754944e-38, %v1000
        %v1002 = vsel %vm999, %v1001, %v997
        %v1003 = vrcp.pop %v876
        %v1004 = vmul.f32 %v876, %v1003
        %v1005 = vsub.f32 1.0, %v1004
        %v1006 = vmul.f32 %v1003, %v1005
        %v1007 = vadd.f32 %v1003, %v1006
        %vm1008 = vweird.f32 %v876
        %vm1009 = vweird.f32 %v1003
        %vm1010 = vmor %vm1008, %vm1009
        %v1011 = vsel %vm1010, %v1003, %v1007
        %v1012 = vand.u32 2147483647, %v876
        %vm1013 = vcmp.eq.f32.partialorder %v1012, 8.507059e+37
        %v1014 = vand.u32 %v876, 2147483648
        %v1015 = vor.u32 1.1754944e-38, %v1014
        %v1016 = vsel %vm1013, %v1015, %v1011
        %v1017 = vrcp.pop %v878
        %v1018 = vmul.f32 %v878, %v1017
        %v1019 = vsub.f32 1.0, %v1018
        %v1020 = vmul.f32 %v1017, %v1019
        %v1021 = vadd.f32 %v1017, %v1020
        %vm1022 = vweird.f32 %v878
        %vm1023 = vweird.f32 %v1017
        %vm1024 = vmor %vm1022, %vm1023
        %v1025 = vsel %vm1024, %v1017, %v1021
        %v1026 = vand.u32 2147483647, %v878
        %vm1027 = vcmp.eq.f32.partialorder %v1026, 8.507059e+37
        %v1028 = vand.u32 %v878, 2147483648
        %v1029 = vor.u32 1.1754944e-38, %v1028
        %v1030 = vsel %vm1027, %v1029, %v1025
        %v1031 = vrcp.pop %v880
        %v1032 = vmul.f32 %v880, %v1031
        %v1033 = vsub.f32 1.0, %v1032
        %v1034 = vmul.f32 %v1031, %v1033
        %v1035 = vadd.f32 %v1031, %v1034
        %vm1036 = vweird.f32 %v880
        %vm1037 = vweird.f32 %v1031
        %vm1038 = vmor %vm1036, %vm1037
        %v1039 = vsel %vm1038, %v1031, %v1035
        %v1040 = vand.u32 2147483647, %v880
        %vm1041 = vcmp.eq.f32.partialorder %v1040, 8.507059e+37
        %v1042 = vand.u32 %v880, 2147483648
        %v1043 = vor.u32 1.1754944e-38, %v1042
        %v1044 = vsel %vm1041, %v1043, %v1039
        %v1045 = vrcp.pop %v882
        %v1046 = vmul.f32 %v882, %v1045
        %v1047 = vsub.f32 1.0, %v1046
        %v1048 = vmul.f32 %v1045, %v1047
        %v1049 = vadd.f32 %v1045, %v1048
        %vm1050 = vweird.f32 %v882
        %vm1051 = vweird.f32 %v1045
        %vm1052 = vmor %vm1050, %vm1051
        %v1053 = vsel %vm1052, %v1045, %v1049
        %v1054 = vand.u32 2147483647, %v882
        %vm1055 = vcmp.eq.f32.partialorder %v1054, 8.507059e+37
        %v1056 = vand.u32 %v882, 2147483648
        %v1057 = vor.u32 1.1754944e-38, %v1056
        %v1058 = vsel %vm1055, %v1057, %v1053
        %v1059 = vrcp.pop %v884
        %v1060 = vmul.f32 %v884, %v1059
        %v1061 = vsub.f32 1.0, %v1060
        %v1062 = vmul.f32 %v1059, %v1061
        %v1063 = vadd.f32 %v1059, %v1062
        %vm1064 = vweird.f32 %v884
        %vm1065 = vweird.f32 %v1059
        %vm1066 = vmor %vm1064, %vm1065
        %v1067 = vsel %vm1066, %v1059, %v1063
        %v1068 = vand.u32 2147483647, %v884
        %vm1069 = vcmp.eq.f32.partialorder %v1068, 8.507059e+37
        %v1070 = vand.u32 %v884, 2147483648
        %v1071 = vor.u32 1.1754944e-38, %v1070
        %v1072 = vsel %vm1069, %v1071, %v1067
        %v1073 = vrcp.pop %v886
        %v1074 = vmul.f32 %v886, %v1073
        %v1075 = vsub.f32 1.0, %v1074
        %v1076 = vmul.f32 %v1073, %v1075
        %v1077 = vadd.f32 %v1073, %v1076
        %vm1078 = vweird.f32 %v886
        %vm1079 = vweird.f32 %v1073
        %vm1080 = vmor %vm1078, %vm1079
        %v1081 = vsel %vm1080, %v1073, %v1077
        %v1082 = vand.u32 2147483647, %v886
        %vm1083 = vcmp.eq.f32.partialorder %v1082, 8.507059e+37
        %v1084 = vand.u32 %v886, 2147483648
        %v1085 = vor.u32 1.1754944e-38, %v1084
        %v1086 = vsel %vm1083, %v1085, %v1081
        %v1087 = vrcp.pop %v888
        %v1088 = vmul.f32 %v888, %v1087
        %v1089 = vsub.f32 1.0, %v1088
        %v1090 = vmul.f32 %v1087, %v1089
        %v1091 = vadd.f32 %v1087, %v1090
        %vm1092 = vweird.f32 %v888
        %vm1093 = vweird.f32 %v1087
        %vm1094 = vmor %vm1092, %vm1093
        %v1095 = vsel %vm1094, %v1087, %v1091
        %v1096 = vand.u32 2147483647, %v888
        %vm1097 = vcmp.eq.f32.partialorder %v1096, 8.507059e+37
        %v1098 = vand.u32 %v888, 2147483648
        %v1099 = vor.u32 1.1754944e-38, %v1098
        %v1100 = vsel %vm1097, %v1099, %v1095
        %v1101 = vrcp.pop %v890
        %v1102 = vmul.f32 %v890, %v1101
        %v1103 = vsub.f32 1.0, %v1102
        %v1104 = vmul.f32 %v1101, %v1103
        %v1105 = vadd.f32 %v1101, %v1104
        %vm1106 = vweird.f32 %v890
        %vm1107 = vweird.f32 %v1101
        %vm1108 = vmor %vm1106, %vm1107
        %v1109 = vsel %vm1108, %v1101, %v1105
        %v1110 = vand.u32 2147483647, %v890
        %vm1111 = vcmp.eq.f32.partialorder %v1110, 8.507059e+37
        %v1112 = vand.u32 %v890, 2147483648
        %v1113 = vor.u32 1.1754944e-38, %v1112
        %v1114 = vsel %vm1111, %v1113, %v1109
        %v1115 = vmul.f32 %v828, %v904
        %v1116 = vmul.f32 %v830, %v918
        %v1117 = vmul.f32 %v832, %v932
        %v1118 = vmul.f32 %v834, %v946
        %v1119 = vmul.f32 %v836, %v960
        %v1120 = vmul.f32 %v838, %v974
        %v1121 = vmul.f32 %v840, %v988
        %v1122 = vmul.f32 %v842, %v1002
        %v1123 = vmul.f32 %v844, %v1016
        %v1124 = vmul.f32 %v846, %v1030
        %v1125 = vmul.f32 %v848, %v1044
        %v1126 = vmul.f32 %v850, %v1058
        %v1127 = vmul.f32 %v852, %v1072
        %v1128 = vmul.f32 %v854, %v1086
        %v1129 = vmul.f32 %v856, %v1100
        %v1130 = vmul.f32 %v858, %v1114
        %1131 = vmatpush.msra.mxu0 %v615
        %1132 = vmatpush.msra.mxu0 %v612
        %1133 = vmatpush.msra.mxu0 %v609
        %1134 = vmatpush.msra.mxu0 %v606
        %1135 = vmatpush.msra.mxu0 %v603
        %1136 = vmatpush.msra.mxu0 %v600
        %1137 = vmatpush.msra.mxu0 %v597
        %1138 = vmatpush.msra.mxu0 %v594
        %1139 = vmatpush.msra.mxu0 %v591
        %1140 = vmatpush.msra.mxu0 %v588
        %1141 = vmatpush.msra.mxu0 %v585
        %1142 = vmatpush.msra.mxu0 %v582
        %1143 = vmatpush.msra.mxu0 %v579
        %1144 = vmatpush.msra.mxu0 %v576
        %1145 = vmatpush.msra.mxu0 %v573
        %1146 = vmatpush.msra.mxu0 %v570
        %1147 = vmatmul.f32.gmra.mxu0 %v1115
        %v1148 = vpop.f32.mrf.mxu0
        %v1149 = vadd.f32 0.0, %v1148
        %1150 = vmatmul.f32.gmra.mxu0 %v1116
        %v1151 = vpop.f32.mrf.mxu0
        %v1152 = vadd.f32 0.0, %v1151
        %1153 = vmatmul.f32.gmra.mxu0 %v1117
        %v1154 = vpop.f32.mrf.mxu0
        %v1155 = vadd.f32 0.0, %v1154
        %1156 = vmatmul.f32.gmra.mxu0 %v1118
        %v1157 = vpop.f32.mrf.mxu0
        %v1158 = vadd.f32 0.0, %v1157
        %1159 = vmatmul.f32.gmra.mxu0 %v1119
        %v1160 = vpop.f32.mrf.mxu0
        %v1161 = vadd.f32 0.0, %v1160
        %1162 = vmatmul.f32.gmra.mxu0 %v1120
        %v1163 = vpop.f32.mrf.mxu0
        %v1164 = vadd.f32 0.0, %v1163
        %1165 = vmatmul.f32.gmra.mxu0 %v1121
        %v1166 = vpop.f32.mrf.mxu0
        %v1167 = vadd.f32 0.0, %v1166
        %1168 = vmatmul.f32.gmra.mxu0 %v1122
        %v1169 = vpop.f32.mrf.mxu0
        %v1170 = vadd.f32 0.0, %v1169
        %1171 = vmatmul.f32.gmra.mxu0 %v1123
        %v1172 = vpop.f32.mrf.mxu0
        %v1173 = vadd.f32 0.0, %v1172
        %1174 = vmatmul.f32.gmra.mxu0 %v1124
        %v1175 = vpop.f32.mrf.mxu0
        %v1176 = vadd.f32 0.0, %v1175
        %1177 = vmatmul.f32.gmra.mxu0 %v1125
        %v1178 = vpop.f32.mrf.mxu0
        %v1179 = vadd.f32 0.0, %v1178
        %1180 = vmatmul.f32.gmra.mxu0 %v1126
        %v1181 = vpop.f32.mrf.mxu0
        %v1182 = vadd.f32 0.0, %v1181
        %1183 = vmatmul.f32.gmra.mxu0 %v1127
        %v1184 = vpop.f32.mrf.mxu0
        %v1185 = vadd.f32 0.0, %v1184
        %1186 = vmatmul.f32.gmra.mxu0 %v1128
        %v1187 = vpop.f32.mrf.mxu0
        %v1188 = vadd.f32 0.0, %v1187
        %1189 = vmatmul.f32.gmra.mxu0 %v1129
        %v1190 = vpop.f32.mrf.mxu0
        %v1191 = vadd.f32 0.0, %v1190
        %1192 = vmatmul.f32.gmra.mxu0 %v1130
        %v1193 = vpop.f32.mrf.mxu0
        %v1194 = vadd.f32 0.0, %v1193
        %1195 = vdwg.mxu0
        %v1196 = vld [vmem:[%s341] sm:$0xff]
        %v1197 = vld [vmem:[%s341 + $0x8] sm:$0xff]
        %v1198 = vld [vmem:[%s341 + $0x10] sm:$0xff]
        %v1199 = vld [vmem:[%s341 + $0x18] sm:$0xff]
        %v1200 = vld [vmem:[%s341 + $0x20] sm:$0xff]
        %v1201 = vld [vmem:[%s341 + $0x28] sm:$0xff]
        %v1202 = vld [vmem:[%s341 + $0x30] sm:$0xff]
        %v1203 = vld [vmem:[%s341 + $0x38] sm:$0xff]
        %v1205 = vsel %vm617, %v1149, 0
        %v1208 = vsel %vm617, %v1152, 0
        %v1211 = vsel %vm617, %v1155, 0
        %v1214 = vsel %vm617, %v1158, 0
        %v1217 = vsel %vm617, %v1161, 0
        %v1220 = vsel %vm617, %v1164, 0
        %v1223 = vsel %vm617, %v1167, 0
        %v1226 = vsel %vm617, %v1170, 0
        %v1229 = vsel %vm617, %v1173, 0
        %v1232 = vsel %vm617, %v1176, 0
        %v1235 = vsel %vm617, %v1179, 0
        %v1238 = vsel %vm617, %v1182, 0
        %v1241 = vsel %vm617, %v1185, 0
        %v1244 = vsel %vm617, %v1188, 0
        %v1247 = vsel %vm617, %v1191, 0
        %v1250 = vsel %vm617, %v1194, 0
        %1252 = vmatpush.msra.mxu0 0.0
        %1253 = vmatpush.msra.mxu0 0.0
        %1254 = vmatpush.msra.mxu0 0.0
        %1255 = vmatpush.msra.mxu0 0.0
        %1256 = vmatpush.msra.mxu0 0.0
        %1257 = vmatpush.msra.mxu0 0.0
        %1258 = vmatpush.msra.mxu0 0.0
        %1259 = vmatpush.msra.mxu0 0.0
        %1260 = vmatpush.msra.mxu0 %v1203
        %1261 = vmatpush.msra.mxu0 %v1202
        %1262 = vmatpush.msra.mxu0 %v1201
        %1263 = vmatpush.msra.mxu0 %v1200
        %1264 = vmatpush.msra.mxu0 %v1199
        %1265 = vmatpush.msra.mxu0 %v1198
        %1266 = vmatpush.msra.mxu0 %v1197
        %1267 = vmatpush.msra.mxu0 %v1196
        %1268 = vmatmul.f32.gmra.mxu0 %v1205
        %v1269 = vpop.f32.mrf.mxu0
        %v1270 = vadd.f32 0.0, %v1269
        %1271 = vmatmul.f32.gmra.mxu0 %v1208
        %v1272 = vpop.f32.mrf.mxu0
        %v1273 = vadd.f32 0.0, %v1272
        %1274 = vmatmul.f32.gmra.mxu0 %v1211
        %v1275 = vpop.f32.mrf.mxu0
        %v1276 = vadd.f32 0.0, %v1275
        %1277 = vmatmul.f32.gmra.mxu0 %v1214
        %v1278 = vpop.f32.mrf.mxu0
        %v1279 = vadd.f32 0.0, %v1278
        %1280 = vmatmul.f32.gmra.mxu0 %v1217
        %v1281 = vpop.f32.mrf.mxu0
        %v1282 = vadd.f32 0.0, %v1281
        %1283 = vmatmul.f32.gmra.mxu0 %v1220
        %v1284 = vpop.f32.mrf.mxu0
        %v1285 = vadd.f32 0.0, %v1284
        %1286 = vmatmul.f32.gmra.mxu0 %v1223
        %v1287 = vpop.f32.mrf.mxu0
        %v1288 = vadd.f32 0.0, %v1287
        %1289 = vmatmul.f32.gmra.mxu0 %v1226
        %v1290 = vpop.f32.mrf.mxu0
        %v1291 = vadd.f32 0.0, %v1290
        %1292 = vmatmul.f32.gmra.mxu0 %v1229
        %v1293 = vpop.f32.mrf.mxu0
        %v1294 = vadd.f32 0.0, %v1293
        %1295 = vmatmul.f32.gmra.mxu0 %v1232
        %v1296 = vpop.f32.mrf.mxu0
        %v1297 = vadd.f32 0.0, %v1296
        %1298 = vmatmul.f32.gmra.mxu0 %v1235
        %v1299 = vpop.f32.mrf.mxu0
        %v1300 = vadd.f32 0.0, %v1299
        %1301 = vmatmul.f32.gmra.mxu0 %v1238
        %v1302 = vpop.f32.mrf.mxu0
        %v1303 = vadd.f32 0.0, %v1302
        %1304 = vmatmul.f32.gmra.mxu0 %v1241
        %v1305 = vpop.f32.mrf.mxu0
        %v1306 = vadd.f32 0.0, %v1305
        %1307 = vmatmul.f32.gmra.mxu0 %v1244
        %v1308 = vpop.f32.mrf.mxu0
        %v1309 = vadd.f32 0.0, %v1308
        %1310 = vmatmul.f32.gmra.mxu0 %v1247
        %v1311 = vpop.f32.mrf.mxu0
        %v1312 = vadd.f32 0.0, %v1311
        %1313 = vmatmul.f32.gmra.mxu0 %v1250
        %v1314 = vpop.f32.mrf.mxu0
        %v1315 = vadd.f32 0.0, %v1314
        %1316 = vdwg.mxu0
        %p1317 = scmp.eq.s32.totalorder %s25, 0
        // Predicated region
        $region45: #{tpu_custom_call.1} parent=43 // pred_check
          %p1318 = pneg %p1317
        $region46: #{tpu_custom_call.1} parent=43 // pred_check_branch
          %1320 = sbr.rel (%p1318) target = $region48
        $region47: #{tpu_custom_call.1} parent=43 // pred_region
          %1321 = vst [vmem:[#allocation2] sm:$0xff] 0.0
          %1322 = vst [vmem:[#allocation2 + $0x8] sm:$0xff] 0.0
          %1323 = vst [vmem:[#allocation2 + $0x10] sm:$0xff] 0.0
          %1324 = vst [vmem:[#allocation2 + $0x18] sm:$0xff] 0.0
          %1325 = vst [vmem:[#allocation2 + $0x20] sm:$0xff] 0.0
          %1326 = vst [vmem:[#allocation2 + $0x28] sm:$0xff] 0.0
          %1327 = vst [vmem:[#allocation2 + $0x30] sm:$0xff] 0.0
          %1328 = vst [vmem:[#allocation2 + $0x38] sm:$0xff] 0.0
          %1329 = vst [vmem:[#allocation2 + $0x40] sm:$0xff] 0.0
          %1330 = vst [vmem:[#allocation2 + $0x48] sm:$0xff] 0.0
          %1331 = vst [vmem:[#allocation2 + $0x50] sm:$0xff] 0.0
          %1332 = vst [vmem:[#allocation2 + $0x58] sm:$0xff] 0.0
          %1333 = vst [vmem:[#allocation2 + $0x60] sm:$0xff] 0.0
          %1334 = vst [vmem:[#allocation2 + $0x68] sm:$0xff] 0.0
          %1335 = vst [vmem:[#allocation2 + $0x70] sm:$0xff] 0.0
          %1336 = vst [vmem:[#allocation2 + $0x78] sm:$0xff] 0.0
        $region48: #{tpu_custom_call.1} parent=43 // pred_fallthru
          _
        %v1337 = vld [vmem:[#allocation2] sm:$0xff]
        %v1338 = vld [vmem:[#allocation2 + $0x8] sm:$0xff]
        %v1339 = vld [vmem:[#allocation2 + $0x10] sm:$0xff]
        %v1340 = vld [vmem:[#allocation2 + $0x18] sm:$0xff]
        %v1341 = vld [vmem:[#allocation2 + $0x20] sm:$0xff]
        %v1342 = vld [vmem:[#allocation2 + $0x28] sm:$0xff]
        %v1343 = vld [vmem:[#allocation2 + $0x30] sm:$0xff]
        %v1344 = vld [vmem:[#allocation2 + $0x38] sm:$0xff]
        %v1345 = vld [vmem:[#allocation2 + $0x40] sm:$0xff]
        %v1346 = vld [vmem:[#allocation2 + $0x48] sm:$0xff]
        %v1347 = vld [vmem:[#allocation2 + $0x50] sm:$0xff]
        %v1348 = vld [vmem:[#allocation2 + $0x58] sm:$0xff]
        %v1349 = vld [vmem:[#allocation2 + $0x60] sm:$0xff]
        %v1350 = vld [vmem:[#allocation2 + $0x68] sm:$0xff]
        %v1351 = vld [vmem:[#allocation2 + $0x70] sm:$0xff]
        %v1352 = vld [vmem:[#allocation2 + $0x78] sm:$0xff]
        %v1353 = vadd.f32 %v1337, %v1270
        %v1354 = vadd.f32 %v1338, %v1273
        %v1355 = vadd.f32 %v1339, %v1276
        %v1356 = vadd.f32 %v1340, %v1279
        %v1357 = vadd.f32 %v1341, %v1282
        %v1358 = vadd.f32 %v1342, %v1285
        %v1359 = vadd.f32 %v1343, %v1288
        %v1360 = vadd.f32 %v1344, %v1291
        %v1361 = vadd.f32 %v1345, %v1294
        %v1362 = vadd.f32 %v1346, %v1297
        %v1363 = vadd.f32 %v1347, %v1300
        %v1364 = vadd.f32 %v1348, %v1303
        %v1365 = vadd.f32 %v1349, %v1306
        %v1366 = vadd.f32 %v1350, %v1309
        %v1367 = vadd.f32 %v1351, %v1312
        %v1368 = vadd.f32 %v1352, %v1315
        %1369 = vst [vmem:[#allocation2] sm:$0xff] %v1353
        %1370 = vst [vmem:[#allocation2 + $0x8] sm:$0xff] %v1354
        %1371 = vst [vmem:[#allocation2 + $0x10] sm:$0xff] %v1355
        %1372 = vst [vmem:[#allocation2 + $0x18] sm:$0xff] %v1356
        %1373 = vst [vmem:[#allocation2 + $0x20] sm:$0xff] %v1357
        %1374 = vst [vmem:[#allocation2 + $0x28] sm:$0xff] %v1358
        %1375 = vst [vmem:[#allocation2 + $0x30] sm:$0xff] %v1359
        %1376 = vst [vmem:[#allocation2 + $0x38] sm:$0xff] %v1360
        %1377 = vst [vmem:[#allocation2 + $0x40] sm:$0xff] %v1361
        %1378 = vst [vmem:[#allocation2 + $0x48] sm:$0xff] %v1362
        %1379 = vst [vmem:[#allocation2 + $0x50] sm:$0xff] %v1363
        %1380 = vst [vmem:[#allocation2 + $0x58] sm:$0xff] %v1364
        %1381 = vst [vmem:[#allocation2 + $0x60] sm:$0xff] %v1365
        %1382 = vst [vmem:[#allocation2 + $0x68] sm:$0xff] %v1366
        %1383 = vst [vmem:[#allocation2 + $0x70] sm:$0xff] %v1367
        %1384 = vst [vmem:[#allocation2 + $0x78] sm:$0xff] %v1368
        %p1385 = scmp.eq.s32.totalorder %s25, 7
        // Predicated region
        $region49: #{tpu_custom_call.1} parent=43 // pred_check
          %p1386 = pneg %p1385
        $region50: #{tpu_custom_call.1} parent=43 // pred_check_branch
          %1388 = sbr.rel (%p1386) target = $region52
        $region51: #{tpu_custom_call.1} parent=43 // pred_region
          %v1389 = vld [vmem:[#allocation2] sm:$0xff]
          %v1390 = vld [vmem:[#allocation2 + $0x8] sm:$0xff]
          %v1391 = vld [vmem:[#allocation2 + $0x10] sm:$0xff]
          %v1392 = vld [vmem:[#allocation2 + $0x18] sm:$0xff]
          %v1393 = vld [vmem:[#allocation2 + $0x20] sm:$0xff]
          %v1394 = vld [vmem:[#allocation2 + $0x28] sm:$0xff]
          %v1395 = vld [vmem:[#allocation2 + $0x30] sm:$0xff]
          %v1396 = vld [vmem:[#allocation2 + $0x38] sm:$0xff]
          %v1397 = vld [vmem:[#allocation2 + $0x40] sm:$0xff]
          %v1398 = vld [vmem:[#allocation2 + $0x48] sm:$0xff]
          %v1399 = vld [vmem:[#allocation2 + $0x50] sm:$0xff]
          %v1400 = vld [vmem:[#allocation2 + $0x58] sm:$0xff]
          %v1401 = vld [vmem:[#allocation2 + $0x60] sm:$0xff]
          %v1402 = vld [vmem:[#allocation2 + $0x68] sm:$0xff]
          %v1403 = vld [vmem:[#allocation2 + $0x70] sm:$0xff]
          %v1404 = vld [vmem:[#allocation2 + $0x78] sm:$0xff]
          %v1405 = vld [vmem:[%s5] sm:$0x1]
          %v1407 = vperm.slane %v1405, 0
          %v1409 = vadd.f32 %v1389, %v1407
          %v1410 = vadd.f32 %v1390, %v1407
          %v1411 = vadd.f32 %v1391, %v1407
          %v1412 = vadd.f32 %v1392, %v1407
          %v1413 = vadd.f32 %v1393, %v1407
          %v1414 = vadd.f32 %v1394, %v1407
          %v1415 = vadd.f32 %v1395, %v1407
          %v1416 = vadd.f32 %v1396, %v1407
          %v1417 = vadd.f32 %v1397, %v1407
          %v1418 = vadd.f32 %v1398, %v1407
          %v1419 = vadd.f32 %v1399, %v1407
          %v1420 = vadd.f32 %v1400, %v1407
          %v1421 = vadd.f32 %v1401, %v1407
          %v1422 = vadd.f32 %v1402, %v1407
          %v1423 = vadd.f32 %v1403, %v1407
          %v1424 = vadd.f32 %v1404, %v1407
          %1425 = vst [vmem:[%s316] sm:$0xff] %v1409
          %1426 = vst [vmem:[%s316 + $0x8] sm:$0xff] %v1410
          %1427 = vst [vmem:[%s316 + $0x10] sm:$0xff] %v1411
          %1428 = vst [vmem:[%s316 + $0x18] sm:$0xff] %v1412
          %1429 = vst [vmem:[%s316 + $0x20] sm:$0xff] %v1413
          %1430 = vst [vmem:[%s316 + $0x28] sm:$0xff] %v1414
          %1431 = vst [vmem:[%s316 + $0x30] sm:$0xff] %v1415
          %1432 = vst [vmem:[%s316 + $0x38] sm:$0xff] %v1416
          %1433 = vst [vmem:[%s316 + $0x40] sm:$0xff] %v1417
          %1434 = vst [vmem:[%s316 + $0x48] sm:$0xff] %v1418
          %1435 = vst [vmem:[%s316 + $0x50] sm:$0xff] %v1419
          %1436 = vst [vmem:[%s316 + $0x58] sm:$0xff] %v1420
          %1437 = vst [vmem:[%s316 + $0x60] sm:$0xff] %v1421
          %1438 = vst [vmem:[%s316 + $0x68] sm:$0xff] %v1422
          %1439 = vst [vmem:[%s316 + $0x70] sm:$0xff] %v1423
          %1440 = vst [vmem:[%s316 + $0x78] sm:$0xff] %v1424
        $region52: #{tpu_custom_call.1} parent=43 // pred_fallthru
          _
        %s1441 = sand.u32 %s191, 1
        %s1442 = scalar_lea.sflag [#allocation4], %s1441
        %s1443 = sand.u32 %s191, 1
        %s1444 = smul.addr %s1443, 128
        %s1445 = scalar_lea.vmem [#allocation3], %s1444
        // Predicated region
        $region53: #{tpu_custom_call.1} parent=43 // pred_check
          %p1446 = pneg %p201
        $region54: #{tpu_custom_call.1} parent=43 // pred_check_branch
          %1448 = sbr.rel (%p1446) target = $region56
        $region55: #{tpu_custom_call.1} parent=43 // pred_region
          %1450 = vsyncadd %s1442, 0
          %s1451 = smul.addr %s24, 16
          %s1452 = smul.addr %s1451, 8
          %s1453 = scalar_lea.hbm %s6, %s1452
          %s1454 = sshll.u32 %s1445, 4
          %s1455 = int_to_ptr.vmem [resolvable:$true] %s1454
          %s1456 = sshll.u32 %s1453, 4
          %s1457 = int_to_ptr.hbm [resolvable:$true] %s1456
          %1462 = dma.vmem_to_hbm [thread:$0]  %s1455, 2048, %s1457, %s1442, 128, 128, 8
        $region56: #{tpu_custom_call.1} parent=43 // pred_fallthru
          _
      $region44: #{tpu_custom_call.1} parent=5 // pred_fallthru
        _
      %p1463 = scmp.le.s32.totalorder 2, %s15
      // Predicated region
      $region57: #{tpu_custom_call.1} parent=5 // pred_check
        %p1464 = pneg %p1463
      $region58: #{tpu_custom_call.1} parent=5 // pred_check_branch
        %1466 = sbr.rel (%p1464) target = $region60
      $region59: #{tpu_custom_call.1} parent=5 // pred_region
        %s1467 = ssub.s32 %s15, 2
        // Predicated region
        $region61: #{tpu_custom_call.1} parent=59 // pred_check
          %p1468 = pneg %p207
        $region62: #{tpu_custom_call.1} parent=59 // pred_check_branch
          %1470 = sbr.rel (%p1468) target = $region64
        $region63: #{tpu_custom_call.1} parent=59 // pred_region
          %s1471 = sand.u32 %s192, 1
          %s1472 = scalar_lea.sflag [#allocation4], %s1471
          %s1473 = sand.u32 %s192, 1
          %s1474 = smul.addr %s1473, 128
          %s1475 = scalar_lea.vmem [#allocation3], %s1474
          %1477 = dma.done %s1472, 2048
        $region64: #{tpu_custom_call.1} parent=59 // pred_fallthru
          _
      $region60: #{tpu_custom_call.1} parent=5 // pred_fallthru
        _
    $region6: #{tpu_custom_call.1} parent=1 // loop_footer
      %s19 = sadd.s32 1, %s15
    $region7: #{tpu_custom_call.1} parent=1 // loop_footer_branch
      %14 = sbr.rel target = $region3
    $region8: #{tpu_custom_call.1} parent=1 // loop_exit
      _
    %1478 = vsyncpa [#allocation4], 1
    %s1479 = scalar_lea.sflag [#allocation4], 1
    %1480 = vsyncpa %s1479, 1

</llo_original>
